<compile_context>
chip_gen: v7x
topology: tpu7x:2x2x1
jax: 0.10.0
libtpu: 0.0.40
codegen_flags: <defaults>
</compile_context>

<pallas_src>
import functools

import numpy as np
import jax
import jax.numpy as jnp
from jax.experimental import pallas as pl
from jax.experimental.pallas import tpu as pltpu


# ----------------------------- Pallas kernel -----------------------------

def _hausdorff_er_kernel(p_ref, t_ref, out_ref, *, alpha: float, erosions: int):
    # p_ref/t_ref blocks: (TB, H, W) in VMEM; out_ref block: (1, 1, 1) f32 partial sum.
    p = p_ref[...].astype(jnp.float32)
    t = t_ref[...].astype(jnp.float32)
    d = p - t
    bound = d * d                                    # (TB, H, W)
    TB, H, W = bound.shape

    # Edge masks, hoisted once per grid step: zero the row/column that pltpu.roll
    # wraps around, so the rolled taps are exactly the zero-padded 5-point stencil.
    row = jax.lax.broadcasted_iota(jnp.int32, (1, H, W), 1)
    col = jax.lax.broadcasted_iota(jnp.int32, (1, H, W), 2)
    not_last_row = (row != H - 1).astype(jnp.float32)
    not_first_row = (row != 0).astype(jnp.float32)
    not_last_col = (col != W - 1).astype(jnp.float32)
    not_first_col = (col != 0).astype(jnp.float32)

    def cross_conv(x):
        # 3x3 cross structuring element, each tap weighted 0.2 (== module's kernel2D).
        # roll by (size - 1) == roll by -1; masks zero the wrapped row/column.
        up = pltpu.roll(x, shift=H - 1, axis=1) * not_last_row    # x[i+1, j]
        dn = pltpu.roll(x, shift=1, axis=1) * not_first_row       # x[i-1, j]
        lf = pltpu.roll(x, shift=W - 1, axis=2) * not_last_col    # x[i, j+1]
        rt = pltpu.roll(x, shift=1, axis=2) * not_first_col       # x[i, j-1]
        return 0.2 * (x + up + dn + lf + rt)

    loss_sum = jnp.zeros((), jnp.float32)
    # erosions is small & static -> unroll in Python (keeps the schedule fully visible).
    for k in range(erosions):
        erosion = jnp.maximum(cross_conv(bound) - 0.5, 0.0)
        # Per-image ptp normalization, folded into scalar scale/offset (no per-element
        # divide, no full-size select).
        mn = jnp.min(erosion, axis=(1, 2), keepdims=True)          # (TB, 1, 1)
        mx = jnp.max(erosion, axis=(1, 2), keepdims=True)          # (TB, 1, 1)
        ptp = mx - mn
        nz = ptp != 0.0
        scale = 1.0 / jnp.where(nz, ptp, 1.0)                      # == 1 when ptp == 0
        mn_eff = jnp.where(nz, mn, 0.0)
        erosion = (erosion - mn_eff) * scale
        bound = erosion
        loss_sum = loss_sum + float((k + 1) ** alpha) * jnp.sum(erosion)

    out_ref[...] = jnp.reshape(loss_sum, (1, 1, 1))


def _pick_batch_tile(B: int, H: int, W: int) -> int:
    """Pick images-per-grid-step: big enough to amortize per-step overhead and interleave
    independent dependency chains, small enough for v7x's 64 MiB VMEM, and (when B >= 2)
    keeping >= 2 grid steps so both v7x TensorCores are used."""
    budget = 24 << 20                         # conservative VMEM budget for live data
    per_image = H * W * 4                     # f32 working image
    # ~24 image-sized live arrays: 2 inputs x 2 pipeline buffers + in-loop temporaries.
    cap = max(1, budget // (24 * per_image))
    tb = 1
    for cand in range(2, min(B, cap) + 1):
        if B % cand == 0 and B // cand >= 2:
            tb = cand
    return tb


def hausdorff_er_loss(pred, target, alpha: float = 2.0, erosions: int = 10,
                      batch_tile: int | None = None):
    """pred, target: (B, 1, H, W) binary masks (NCHW). Returns scalar loss."""
    assert pred.ndim == 4 and target.ndim == 4 and pred.shape == target.shape
    B, C, H, W = pred.shape
    assert C == 1, "HausdorffERLoss uses one binary channel"
    # TODO(synk): the 5-D volumetric (kernel3D) branch of the module is not implemented.

    # Keep the inputs in their native dtype (cast happens in-kernel); a wrapper-side
    # convert would only add HBM traffic for this compute-bound kernel.
    p = pred.reshape(B, H, W)
    t = target.reshape(B, H, W)

    if batch_tile is None:
        batch_tile = _pick_batch_tile(B, H, W)
    assert B % batch_tile == 0
    num_blocks = B // batch_tile

    kernel = functools.partial(_hausdorff_er_kernel, alpha=alpha, erosions=erosions)

    in_bytes = p.dtype.itemsize + t.dtype.itemsize
    cost = pl.CostEstimate(
        flops=int(erosions) * 16 * B * H * W,
        transcendentals=0,
        bytes_accessed=int(B * H * W * in_bytes + num_blocks * 4),
    )

    partial_sums = pl.pallas_call(
        kernel,
        out_shape=jax.ShapeDtypeStruct((num_blocks, 1, 1), jnp.float32),
        grid=(num_blocks,),
        in_specs=[
            pl.BlockSpec((batch_tile, H, W), lambda b: (b, 0, 0)),
            pl.BlockSpec((batch_tile, H, W), lambda b: (b, 0, 0)),
        ],
        out_specs=pl.BlockSpec((1, 1, 1), lambda b: (b, 0, 0)),
        compiler_params=pltpu.CompilerParams(
            dimension_semantics=("parallel",),
            vmem_limit_bytes=48 * 1024 * 1024,
        ),
        cost_estimate=cost,
    )(p, t)

    # Final mean over all B*1*H*W elements (cheap glue in plain JAX).
    return jnp.sum(partial_sums) / (B * H * W)


# ------------------------- Pure-numpy reference --------------------------

def _reference_loss(pred, target, alpha=2.0, erosions=10):
    pred = np.asarray(pred, np.float32)
    target = np.asarray(target, np.float32)
    bound = (pred - target) ** 2                      # (B, 1, H, W)
    eroted = np.zeros_like(bound)
    for b in range(bound.shape[0]):
        cur = bound[b].copy()                         # (1, H, W)
        for k in range(erosions):
            xp = np.pad(cur[0], 1)
            conv = np.float32(0.2) * (
                xp[1:-1, 1:-1] + xp[:-2, 1:-1] + xp[2:, 1:-1]
                + xp[1:-1, :-2] + xp[1:-1, 2:]
            )
            erosion = conv - np.float32(0.5)
            erosion[erosion < 0] = 0
            ptp = erosion.max() - erosion.min()
            if ptp != 0:
                erosion = (erosion - erosion.min()) / ptp
            cur = erosion[None].astype(np.float32)
            eroted[b] += cur * (k + 1) ** alpha
    return eroted.mean()


# --------------------------------- main -----------------------------------

if __name__ == "__main__":
    key = jax.random.PRNGKey(0)
    kp, kt = jax.random.split(key)
    B, C, H, W = 2, 1, 16, 16
    # binary foreground masks, as the module expects (1 - fg, 0 - bg)
    pred = (jax.random.uniform(kp, (B, C, H, W)) > 0.5).astype(jnp.float32)
    target = (jax.random.uniform(kt, (B, C, H, W)) > 0.5).astype(jnp.float32)

    loss = hausdorff_er_loss(pred, target, alpha=2.0, erosions=10)
    loss = jax.block_until_ready(loss)

    ref = _reference_loss(np.asarray(pred), np.asarray(target), alpha=2.0, erosions=10)
    np.testing.assert_allclose(np.asarray(loss), ref, rtol=1e-5, atol=1e-5)

    print("KERNEL_OK")
</pallas_src>

<mosaic_0001>
module attributes {stable_mosaic.version = 11 : i64} {
  func.func @_hausdorff_er_kernel(%arg0: i32, %arg1: memref<1x16x16xf32, #tpu.memory_space<vmem>>, %arg2: memref<1x16x16xf32, #tpu.memory_space<vmem>>, %arg3: memref<1x1x1xf32, #tpu.memory_space<vmem>>) attributes {dimension_semantics = [#tpu.dimension_semantics<parallel>], iteration_bounds = array<i64: 2>, scalar_prefetch = 0 : i64, scratch_operands = 0 : i64, tpu.core_type = #tpu.core_type<tc>, window_params = [{transform_indices = @transform_0, window_bounds = array<i64: 1, 16, 16>}, {transform_indices = @transform_1, window_bounds = array<i64: 1, 16, 16>}, {transform_indices = @transform_2, window_bounds = array<i64: 1, 1, 1>}]} {
    %c0 = arith.constant 0 : index
    %c0_0 = arith.constant 0 : index
    %c0_1 = arith.constant 0 : index
    %0 = vector.load %arg1[%c0, %c0_0, %c0_1] : memref<1x16x16xf32, #tpu.memory_space<vmem>>, vector<1x16x16xf32>
    %c0_2 = arith.constant 0 : index
    %c0_3 = arith.constant 0 : index
    %c0_4 = arith.constant 0 : index
    %1 = vector.load %arg2[%c0_2, %c0_3, %c0_4] : memref<1x16x16xf32, #tpu.memory_space<vmem>>, vector<1x16x16xf32>
    %2 = arith.subf %0, %1 : vector<1x16x16xf32>
    %3 = arith.mulf %2, %2 : vector<1x16x16xf32>
    %4 = tpu.iota {dimensions = array<i32: 1>} : vector<1x16x16xi32>
    %5 = tpu.iota {dimensions = array<i32: 2>} : vector<1x16x16xi32>
    %c15_i32 = arith.constant 15 : i32
    %6 = vector.broadcast %c15_i32 : i32 to vector<1x16x16xi32>
    %7 = arith.cmpi ne, %4, %6 : vector<1x16x16xi32>
    %8 = arith.extui %7 : vector<1x16x16xi1> to vector<1x16x16xi32>
    %9 = arith.sitofp %8 : vector<1x16x16xi32> to vector<1x16x16xf32>
    %c0_i32 = arith.constant 0 : i32
    %10 = vector.broadcast %c0_i32 : i32 to vector<1x16x16xi32>
    %11 = arith.cmpi ne, %4, %10 : vector<1x16x16xi32>
    %12 = arith.extui %11 : vector<1x16x16xi1> to vector<1x16x16xi32>
    %13 = arith.sitofp %12 : vector<1x16x16xi32> to vector<1x16x16xf32>
    %c15_i32_5 = arith.constant 15 : i32
    %14 = vector.broadcast %c15_i32_5 : i32 to vector<1x16x16xi32>
    %15 = arith.cmpi ne, %5, %14 : vector<1x16x16xi32>
    %16 = arith.extui %15 : vector<1x16x16xi1> to vector<1x16x16xi32>
    %17 = arith.sitofp %16 : vector<1x16x16xi32> to vector<1x16x16xf32>
    %c0_i32_6 = arith.constant 0 : i32
    %18 = vector.broadcast %c0_i32_6 : i32 to vector<1x16x16xi32>
    %19 = arith.cmpi ne, %5, %18 : vector<1x16x16xi32>
    %20 = arith.extui %19 : vector<1x16x16xi1> to vector<1x16x16xi32>
    %21 = arith.sitofp %20 : vector<1x16x16xi32> to vector<1x16x16xf32>
    %c15_i32_7 = arith.constant 15 : i32
    %22 = tpu.dynamic_rotate %3 by %c15_i32_7 dim 1 : vector<1x16x16xf32>, i32 -> vector<1x16x16xf32>
    %23 = arith.mulf %22, %9 : vector<1x16x16xf32>
    %c1_i32 = arith.constant 1 : i32
    %24 = tpu.dynamic_rotate %3 by %c1_i32 dim 1 : vector<1x16x16xf32>, i32 -> vector<1x16x16xf32>
    %25 = arith.mulf %24, %13 : vector<1x16x16xf32>
    %c15_i32_8 = arith.constant 15 : i32
    %26 = tpu.dynamic_rotate %3 by %c15_i32_8 dim 2 : vector<1x16x16xf32>, i32 -> vector<1x16x16xf32>
    %27 = arith.mulf %26, %17 : vector<1x16x16xf32>
    %c1_i32_9 = arith.constant 1 : i32
    %28 = tpu.dynamic_rotate %3 by %c1_i32_9 dim 2 : vector<1x16x16xf32>, i32 -> vector<1x16x16xf32>
    %29 = arith.mulf %28, %21 : vector<1x16x16xf32>
    %30 = arith.addf %3, %23 : vector<1x16x16xf32>
    %31 = arith.addf %30, %25 : vector<1x16x16xf32>
    %32 = arith.addf %31, %27 : vector<1x16x16xf32>
    %33 = arith.addf %32, %29 : vector<1x16x16xf32>
    %cst = arith.constant 2.000000e-01 : f32
    %34 = vector.broadcast %cst : f32 to vector<1x16x16xf32>
    %35 = arith.mulf %34, %33 : vector<1x16x16xf32>
    %cst_10 = arith.constant 5.000000e-01 : f32
    %36 = vector.broadcast %cst_10 : f32 to vector<1x16x16xf32>
    %37 = arith.subf %35, %36 : vector<1x16x16xf32>
    %cst_11 = arith.constant 0.000000e+00 : f32
    %38 = vector.broadcast %cst_11 : f32 to vector<1x16x16xf32>
    %39 = arith.maximumf %37, %38 : vector<1x16x16xf32>
    %cst_12 = arith.constant dense<0x7F800000> : vector<1xf32>
    %40 = vector.multi_reduction <minimumf>, %39, %cst_12 [1, 2] : vector<1x16x16xf32> to vector<1xf32>
    %41 = vector.shape_cast %40 : vector<1xf32> to vector<1x1x1xf32>
    %cst_13 = arith.constant dense<0xFF800000> : vector<1xf32>
    %42 = vector.multi_reduction <maximumf>, %39, %cst_13 [1, 2] : vector<1x16x16xf32> to vector<1xf32>
    %43 = vector.shape_cast %42 : vector<1xf32> to vector<1x1x1xf32>
    %44 = arith.subf %43, %41 : vector<1x1x1xf32>
    %cst_14 = arith.constant 0.000000e+00 : f32
    %45 = vector.broadcast %cst_14 : f32 to vector<1x1x1xf32>
    %46 = arith.cmpf one, %44, %45 : vector<1x1x1xf32>
    %cst_15 = arith.constant 1.000000e+00 : f32
    %47 = vector.broadcast %cst_15 : f32 to vector<1x1x1xf32>
    %48 = arith.select %46, %44, %47 : vector<1x1x1xi1>, vector<1x1x1xf32>
    %cst_16 = arith.constant 1.000000e+00 : f32
    %49 = vector.broadcast %cst_16 : f32 to vector<1x1x1xf32>
    %50 = arith.divf %49, %48 : vector<1x1x1xf32>
    %cst_17 = arith.constant 0.000000e+00 : f32
    %51 = vector.broadcast %cst_17 : f32 to vector<1x1x1xf32>
    %52 = arith.select %46, %41, %51 : vector<1x1x1xi1>, vector<1x1x1xf32>
    %53 = vector.broadcast %52 : vector<1x1x1xf32> to vector<1x16x16xf32>
    %54 = arith.subf %39, %53 : vector<1x16x16xf32>
    %55 = vector.broadcast %50 : vector<1x1x1xf32> to vector<1x16x16xf32>
    %56 = arith.mulf %54, %55 : vector<1x16x16xf32>
    %57 = vector.shape_cast %56 : vector<1x16x16xf32> to vector<1x1x16x16xf32>
    %cst_18 = arith.constant dense<0.000000e+00> : vector<1xf32>
    %58 = vector.multi_reduction <add>, %57, %cst_18 [1, 2, 3] : vector<1x1x16x16xf32> to vector<1xf32>
    %59 = vector.shape_cast %58 : vector<1xf32> to vector<1x1x1x1xf32>
    %60 = vector.extract %59[0, 0, 0, 0] : f32 from vector<1x1x1x1xf32>
    %cst_19 = arith.constant 1.000000e+00 : f32
    %61 = arith.mulf %cst_19, %60 : f32
    %cst_20 = arith.constant 0.000000e+00 : f32
    %62 = arith.addf %cst_20, %61 : f32
    %c15_i32_21 = arith.constant 15 : i32
    %63 = tpu.dynamic_rotate %56 by %c15_i32_21 dim 1 : vector<1x16x16xf32>, i32 -> vector<1x16x16xf32>
    %64 = arith.mulf %63, %9 : vector<1x16x16xf32>
    %c1_i32_22 = arith.constant 1 : i32
    %65 = tpu.dynamic_rotate %56 by %c1_i32_22 dim 1 : vector<1x16x16xf32>, i32 -> vector<1x16x16xf32>
    %66 = arith.mulf %65, %13 : vector<1x16x16xf32>
    %c15_i32_23 = arith.constant 15 : i32
    %67 = tpu.dynamic_rotate %56 by %c15_i32_23 dim 2 : vector<1x16x16xf32>, i32 -> vector<1x16x16xf32>
    %68 = arith.mulf %67, %17 : vector<1x16x16xf32>
    %c1_i32_24 = arith.constant 1 : i32
    %69 = tpu.dynamic_rotate %56 by %c1_i32_24 dim 2 : vector<1x16x16xf32>, i32 -> vector<1x16x16xf32>
    %70 = arith.mulf %69, %21 : vector<1x16x16xf32>
    %71 = arith.addf %56, %64 : vector<1x16x16xf32>
    %72 = arith.addf %71, %66 : vector<1x16x16xf32>
    %73 = arith.addf %72, %68 : vector<1x16x16xf32>
    %74 = arith.addf %73, %70 : vector<1x16x16xf32>
    %cst_25 = arith.constant 2.000000e-01 : f32
    %75 = vector.broadcast %cst_25 : f32 to vector<1x16x16xf32>
    %76 = arith.mulf %75, %74 : vector<1x16x16xf32>
    %cst_26 = arith.constant 5.000000e-01 : f32
    %77 = vector.broadcast %cst_26 : f32 to vector<1x16x16xf32>
    %78 = arith.subf %76, %77 : vector<1x16x16xf32>
    %cst_27 = arith.constant 0.000000e+00 : f32
    %79 = vector.broadcast %cst_27 : f32 to vector<1x16x16xf32>
    %80 = arith.maximumf %78, %79 : vector<1x16x16xf32>
    %cst_28 = arith.constant dense<0x7F800000> : vector<1xf32>
    %81 = vector.multi_reduction <minimumf>, %80, %cst_28 [1, 2] : vector<1x16x16xf32> to vector<1xf32>
    %82 = vector.shape_cast %81 : vector<1xf32> to vector<1x1x1xf32>
    %cst_29 = arith.constant dense<0xFF800000> : vector<1xf32>
    %83 = vector.multi_reduction <maximumf>, %80, %cst_29 [1, 2] : vector<1x16x16xf32> to vector<1xf32>
    %84 = vector.shape_cast %83 : vector<1xf32> to vector<1x1x1xf32>
    %85 = arith.subf %84, %82 : vector<1x1x1xf32>
    %cst_30 = arith.constant 0.000000e+00 : f32
    %86 = vector.broadcast %cst_30 : f32 to vector<1x1x1xf32>
    %87 = arith.cmpf one, %85, %86 : vector<1x1x1xf32>
    %cst_31 = arith.constant 1.000000e+00 : f32
    %88 = vector.broadcast %cst_31 : f32 to vector<1x1x1xf32>
    %89 = arith.select %87, %85, %88 : vector<1x1x1xi1>, vector<1x1x1xf32>
    %cst_32 = arith.constant 1.000000e+00 : f32
    %90 = vector.broadcast %cst_32 : f32 to vector<1x1x1xf32>
    %91 = arith.divf %90, %89 : vector<1x1x1xf32>
    %cst_33 = arith.constant 0.000000e+00 : f32
    %92 = vector.broadcast %cst_33 : f32 to vector<1x1x1xf32>
    %93 = arith.select %87, %82, %92 : vector<1x1x1xi1>, vector<1x1x1xf32>
    %94 = vector.broadcast %93 : vector<1x1x1xf32> to vector<1x16x16xf32>
    %95 = arith.subf %80, %94 : vector<1x16x16xf32>
    %96 = vector.broadcast %91 : vector<1x1x1xf32> to vector<1x16x16xf32>
    %97 = arith.mulf %95, %96 : vector<1x16x16xf32>
    %98 = vector.shape_cast %97 : vector<1x16x16xf32> to vector<1x1x16x16xf32>
    %cst_34 = arith.constant dense<0.000000e+00> : vector<1xf32>
    %99 = vector.multi_reduction <add>, %98, %cst_34 [1, 2, 3] : vector<1x1x16x16xf32> to vector<1xf32>
    %100 = vector.shape_cast %99 : vector<1xf32> to vector<1x1x1x1xf32>
    %101 = vector.extract %100[0, 0, 0, 0] : f32 from vector<1x1x1x1xf32>
    %cst_35 = arith.constant 4.000000e+00 : f32
    %102 = arith.mulf %cst_35, %101 : f32
    %103 = arith.addf %62, %102 : f32
    %c15_i32_36 = arith.constant 15 : i32
    %104 = tpu.dynamic_rotate %97 by %c15_i32_36 dim 1 : vector<1x16x16xf32>, i32 -> vector<1x16x16xf32>
    %105 = arith.mulf %104, %9 : vector<1x16x16xf32>
    %c1_i32_37 = arith.constant 1 : i32
    %106 = tpu.dynamic_rotate %97 by %c1_i32_37 dim 1 : vector<1x16x16xf32>, i32 -> vector<1x16x16xf32>
    %107 = arith.mulf %106, %13 : vector<1x16x16xf32>
    %c15_i32_38 = arith.constant 15 : i32
    %108 = tpu.dynamic_rotate %97 by %c15_i32_38 dim 2 : vector<1x16x16xf32>, i32 -> vector<1x16x16xf32>
    %109 = arith.mulf %108, %17 : vector<1x16x16xf32>
    %c1_i32_39 = arith.constant 1 : i32
    %110 = tpu.dynamic_rotate %97 by %c1_i32_39 dim 2 : vector<1x16x16xf32>, i32 -> vector<1x16x16xf32>
    %111 = arith.mulf %110, %21 : vector<1x16x16xf32>
    %112 = arith.addf %97, %105 : vector<1x16x16xf32>
    %113 = arith.addf %112, %107 : vector<1x16x16xf32>
    %114 = arith.addf %113, %109 : vector<1x16x16xf32>
    %115 = arith.addf %114, %111 : vector<1x16x16xf32>
    %cst_40 = arith.constant 2.000000e-01 : f32
    %116 = vector.broadcast %cst_40 : f32 to vector<1x16x16xf32>
    %117 = arith.mulf %116, %115 : vector<1x16x16xf32>
    %cst_41 = arith.constant 5.000000e-01 : f32
    %118 = vector.broadcast %cst_41 : f32 to vector<1x16x16xf32>
    %119 = arith.subf %117, %118 : vector<1x16x16xf32>
    %cst_42 = arith.constant 0.000000e+00 : f32
    %120 = vector.broadcast %cst_42 : f32 to vector<1x16x16xf32>
    %121 = arith.maximumf %119, %120 : vector<1x16x16xf32>
    %cst_43 = arith.constant dense<0x7F800000> : vector<1xf32>
    %122 = vector.multi_reduction <minimumf>, %121, %cst_43 [1, 2] : vector<1x16x16xf32> to vector<1xf32>
    %123 = vector.shape_cast %122 : vector<1xf32> to vector<1x1x1xf32>
    %cst_44 = arith.constant dense<0xFF800000> : vector<1xf32>
    %124 = vector.multi_reduction <maximumf>, %121, %cst_44 [1, 2] : vector<1x16x16xf32> to vector<1xf32>
    %125 = vector.shape_cast %124 : vector<1xf32> to vector<1x1x1xf32>
    %126 = arith.subf %125, %123 : vector<1x1x1xf32>
    %cst_45 = arith.constant 0.000000e+00 : f32
    %127 = vector.broadcast %cst_45 : f32 to vector<1x1x1xf32>
    %128 = arith.cmpf one, %126, %127 : vector<1x1x1xf32>
    %cst_46 = arith.constant 1.000000e+00 : f32
    %129 = vector.broadcast %cst_46 : f32 to vector<1x1x1xf32>
    %130 = arith.select %128, %126, %129 : vector<1x1x1xi1>, vector<1x1x1xf32>
    %cst_47 = arith.constant 1.000000e+00 : f32
    %131 = vector.broadcast %cst_47 : f32 to vector<1x1x1xf32>
    %132 = arith.divf %131, %130 : vector<1x1x1xf32>
    %cst_48 = arith.constant 0.000000e+00 : f32
    %133 = vector.broadcast %cst_48 : f32 to vector<1x1x1xf32>
    %134 = arith.select %128, %123, %133 : vector<1x1x1xi1>, vector<1x1x1xf32>
    %135 = vector.broadcast %134 : vector<1x1x1xf32> to vector<1x16x16xf32>
    %136 = arith.subf %121, %135 : vector<1x16x16xf32>
    %137 = vector.broadcast %132 : vector<1x1x1xf32> to vector<1x16x16xf32>
    %138 = arith.mulf %136, %137 : vector<1x16x16xf32>
    %139 = vector.shape_cast %138 : vector<1x16x16xf32> to vector<1x1x16x16xf32>
    %cst_49 = arith.constant dense<0.000000e+00> : vector<1xf32>
    %140 = vector.multi_reduction <add>, %139, %cst_49 [1, 2, 3] : vector<1x1x16x16xf32> to vector<1xf32>
    %141 = vector.shape_cast %140 : vector<1xf32> to vector<1x1x1x1xf32>
    %142 = vector.extract %141[0, 0, 0, 0] : f32 from vector<1x1x1x1xf32>
    %cst_50 = arith.constant 9.000000e+00 : f32
    %143 = arith.mulf %cst_50, %142 : f32
    %144 = arith.addf %103, %143 : f32
    %c15_i32_51 = arith.constant 15 : i32
    %145 = tpu.dynamic_rotate %138 by %c15_i32_51 dim 1 : vector<1x16x16xf32>, i32 -> vector<1x16x16xf32>
    %146 = arith.mulf %145, %9 : vector<1x16x16xf32>
    %c1_i32_52 = arith.constant 1 : i32
    %147 = tpu.dynamic_rotate %138 by %c1_i32_52 dim 1 : vector<1x16x16xf32>, i32 -> vector<1x16x16xf32>
    %148 = arith.mulf %147, %13 : vector<1x16x16xf32>
    %c15_i32_53 = arith.constant 15 : i32
    %149 = tpu.dynamic_rotate %138 by %c15_i32_53 dim 2 : vector<1x16x16xf32>, i32 -> vector<1x16x16xf32>
    %150 = arith.mulf %149, %17 : vector<1x16x16xf32>
    %c1_i32_54 = arith.constant 1 : i32
    %151 = tpu.dynamic_rotate %138 by %c1_i32_54 dim 2 : vector<1x16x16xf32>, i32 -> vector<1x16x16xf32>
    %152 = arith.mulf %151, %21 : vector<1x16x16xf32>
    %153 = arith.addf %138, %146 : vector<1x16x16xf32>
    %154 = arith.addf %153, %148 : vector<1x16x16xf32>
    %155 = arith.addf %154, %150 : vector<1x16x16xf32>
    %156 = arith.addf %155, %152 : vector<1x16x16xf32>
    %cst_55 = arith.constant 2.000000e-01 : f32
    %157 = vector.broadcast %cst_55 : f32 to vector<1x16x16xf32>
    %158 = arith.mulf %157, %156 : vector<1x16x16xf32>
    %cst_56 = arith.constant 5.000000e-01 : f32
    %159 = vector.broadcast %cst_56 : f32 to vector<1x16x16xf32>
    %160 = arith.subf %158, %159 : vector<1x16x16xf32>
    %cst_57 = arith.constant 0.000000e+00 : f32
    %161 = vector.broadcast %cst_57 : f32 to vector<1x16x16xf32>
    %162 = arith.maximumf %160, %161 : vector<1x16x16xf32>
    %cst_58 = arith.constant dense<0x7F800000> : vector<1xf32>
    %163 = vector.multi_reduction <minimumf>, %162, %cst_58 [1, 2] : vector<1x16x16xf32> to vector<1xf32>
    %164 = vector.shape_cast %163 : vector<1xf32> to vector<1x1x1xf32>
    %cst_59 = arith.constant dense<0xFF800000> : vector<1xf32>
    %165 = vector.multi_reduction <maximumf>, %162, %cst_59 [1, 2] : vector<1x16x16xf32> to vector<1xf32>
    %166 = vector.shape_cast %165 : vector<1xf32> to vector<1x1x1xf32>
    %167 = arith.subf %166, %164 : vector<1x1x1xf32>
    %cst_60 = arith.constant 0.000000e+00 : f32
    %168 = vector.broadcast %cst_60 : f32 to vector<1x1x1xf32>
    %169 = arith.cmpf one, %167, %168 : vector<1x1x1xf32>
    %cst_61 = arith.constant 1.000000e+00 : f32
    %170 = vector.broadcast %cst_61 : f32 to vector<1x1x1xf32>
    %171 = arith.select %169, %167, %170 : vector<1x1x1xi1>, vector<1x1x1xf32>
    %cst_62 = arith.constant 1.000000e+00 : f32
    %172 = vector.broadcast %cst_62 : f32 to vector<1x1x1xf32>
    %173 = arith.divf %172, %171 : vector<1x1x1xf32>
    %cst_63 = arith.constant 0.000000e+00 : f32
    %174 = vector.broadcast %cst_63 : f32 to vector<1x1x1xf32>
    %175 = arith.select %169, %164, %174 : vector<1x1x1xi1>, vector<1x1x1xf32>
    %176 = vector.broadcast %175 : vector<1x1x1xf32> to vector<1x16x16xf32>
    %177 = arith.subf %162, %176 : vector<1x16x16xf32>
    %178 = vector.broadcast %173 : vector<1x1x1xf32> to vector<1x16x16xf32>
    %179 = arith.mulf %177, %178 : vector<1x16x16xf32>
    %180 = vector.shape_cast %179 : vector<1x16x16xf32> to vector<1x1x16x16xf32>
    %cst_64 = arith.constant dense<0.000000e+00> : vector<1xf32>
    %181 = vector.multi_reduction <add>, %180, %cst_64 [1, 2, 3] : vector<1x1x16x16xf32> to vector<1xf32>
    %182 = vector.shape_cast %181 : vector<1xf32> to vector<1x1x1x1xf32>
    %183 = vector.extract %182[0, 0, 0, 0] : f32 from vector<1x1x1x1xf32>
    %cst_65 = arith.constant 1.600000e+01 : f32
    %184 = arith.mulf %cst_65, %183 : f32
    %185 = arith.addf %144, %184 : f32
    %c15_i32_66 = arith.constant 15 : i32
    %186 = tpu.dynamic_rotate %179 by %c15_i32_66 dim 1 : vector<1x16x16xf32>, i32 -> vector<1x16x16xf32>
    %187 = arith.mulf %186, %9 : vector<1x16x16xf32>
    %c1_i32_67 = arith.constant 1 : i32
    %188 = tpu.dynamic_rotate %179 by %c1_i32_67 dim 1 : vector<1x16x16xf32>, i32 -> vector<1x16x16xf32>
    %189 = arith.mulf %188, %13 : vector<1x16x16xf32>
    %c15_i32_68 = arith.constant 15 : i32
    %190 = tpu.dynamic_rotate %179 by %c15_i32_68 dim 2 : vector<1x16x16xf32>, i32 -> vector<1x16x16xf32>
    %191 = arith.mulf %190, %17 : vector<1x16x16xf32>
    %c1_i32_69 = arith.constant 1 : i32
    %192 = tpu.dynamic_rotate %179 by %c1_i32_69 dim 2 : vector<1x16x16xf32>, i32 -> vector<1x16x16xf32>
    %193 = arith.mulf %192, %21 : vector<1x16x16xf32>
    %194 = arith.addf %179, %187 : vector<1x16x16xf32>
    %195 = arith.addf %194, %189 : vector<1x16x16xf32>
    %196 = arith.addf %195, %191 : vector<1x16x16xf32>
    %197 = arith.addf %196, %193 : vector<1x16x16xf32>
    %cst_70 = arith.constant 2.000000e-01 : f32
    %198 = vector.broadcast %cst_70 : f32 to vector<1x16x16xf32>
    %199 = arith.mulf %198, %197 : vector<1x16x16xf32>
    %cst_71 = arith.constant 5.000000e-01 : f32
    %200 = vector.broadcast %cst_71 : f32 to vector<1x16x16xf32>
    %201 = arith.subf %199, %200 : vector<1x16x16xf32>
    %cst_72 = arith.constant 0.000000e+00 : f32
    %202 = vector.broadcast %cst_72 : f32 to vector<1x16x16xf32>
    %203 = arith.maximumf %201, %202 : vector<1x16x16xf32>
    %cst_73 = arith.constant dense<0x7F800000> : vector<1xf32>
    %204 = vector.multi_reduction <minimumf>, %203, %cst_73 [1, 2] : vector<1x16x16xf32> to vector<1xf32>
    %205 = vector.shape_cast %204 : vector<1xf32> to vector<1x1x1xf32>
    %cst_74 = arith.constant dense<0xFF800000> : vector<1xf32>
    %206 = vector.multi_reduction <maximumf>, %203, %cst_74 [1, 2] : vector<1x16x16xf32> to vector<1xf32>
    %207 = vector.shape_cast %206 : vector<1xf32> to vector<1x1x1xf32>
    %208 = arith.subf %207, %205 : vector<1x1x1xf32>
    %cst_75 = arith.constant 0.000000e+00 : f32
    %209 = vector.broadcast %cst_75 : f32 to vector<1x1x1xf32>
    %210 = arith.cmpf one, %208, %209 : vector<1x1x1xf32>
    %cst_76 = arith.constant 1.000000e+00 : f32
    %211 = vector.broadcast %cst_76 : f32 to vector<1x1x1xf32>
    %212 = arith.select %210, %208, %211 : vector<1x1x1xi1>, vector<1x1x1xf32>
    %cst_77 = arith.constant 1.000000e+00 : f32
    %213 = vector.broadcast %cst_77 : f32 to vector<1x1x1xf32>
    %214 = arith.divf %213, %212 : vector<1x1x1xf32>
    %cst_78 = arith.constant 0.000000e+00 : f32
    %215 = vector.broadcast %cst_78 : f32 to vector<1x1x1xf32>
    %216 = arith.select %210, %205, %215 : vector<1x1x1xi1>, vector<1x1x1xf32>
    %217 = vector.broadcast %216 : vector<1x1x1xf32> to vector<1x16x16xf32>
    %218 = arith.subf %203, %217 : vector<1x16x16xf32>
    %219 = vector.broadcast %214 : vector<1x1x1xf32> to vector<1x16x16xf32>
    %220 = arith.mulf %218, %219 : vector<1x16x16xf32>
    %221 = vector.shape_cast %220 : vector<1x16x16xf32> to vector<1x1x16x16xf32>
    %cst_79 = arith.constant dense<0.000000e+00> : vector<1xf32>
    %222 = vector.multi_reduction <add>, %221, %cst_79 [1, 2, 3] : vector<1x1x16x16xf32> to vector<1xf32>
    %223 = vector.shape_cast %222 : vector<1xf32> to vector<1x1x1x1xf32>
    %224 = vector.extract %223[0, 0, 0, 0] : f32 from vector<1x1x1x1xf32>
    %cst_80 = arith.constant 2.500000e+01 : f32
    %225 = arith.mulf %cst_80, %224 : f32
    %226 = arith.addf %185, %225 : f32
    %c15_i32_81 = arith.constant 15 : i32
    %227 = tpu.dynamic_rotate %220 by %c15_i32_81 dim 1 : vector<1x16x16xf32>, i32 -> vector<1x16x16xf32>
    %228 = arith.mulf %227, %9 : vector<1x16x16xf32>
    %c1_i32_82 = arith.constant 1 : i32
    %229 = tpu.dynamic_rotate %220 by %c1_i32_82 dim 1 : vector<1x16x16xf32>, i32 -> vector<1x16x16xf32>
    %230 = arith.mulf %229, %13 : vector<1x16x16xf32>
    %c15_i32_83 = arith.constant 15 : i32
    %231 = tpu.dynamic_rotate %220 by %c15_i32_83 dim 2 : vector<1x16x16xf32>, i32 -> vector<1x16x16xf32>
    %232 = arith.mulf %231, %17 : vector<1x16x16xf32>
    %c1_i32_84 = arith.constant 1 : i32
    %233 = tpu.dynamic_rotate %220 by %c1_i32_84 dim 2 : vector<1x16x16xf32>, i32 -> vector<1x16x16xf32>
    %234 = arith.mulf %233, %21 : vector<1x16x16xf32>
    %235 = arith.addf %220, %228 : vector<1x16x16xf32>
    %236 = arith.addf %235, %230 : vector<1x16x16xf32>
    %237 = arith.addf %236, %232 : vector<1x16x16xf32>
    %238 = arith.addf %237, %234 : vector<1x16x16xf32>
    %cst_85 = arith.constant 2.000000e-01 : f32
    %239 = vector.broadcast %cst_85 : f32 to vector<1x16x16xf32>
    %240 = arith.mulf %239, %238 : vector<1x16x16xf32>
    %cst_86 = arith.constant 5.000000e-01 : f32
    %241 = vector.broadcast %cst_86 : f32 to vector<1x16x16xf32>
    %242 = arith.subf %240, %241 : vector<1x16x16xf32>
    %cst_87 = arith.constant 0.000000e+00 : f32
    %243 = vector.broadcast %cst_87 : f32 to vector<1x16x16xf32>
    %244 = arith.maximumf %242, %243 : vector<1x16x16xf32>
    %cst_88 = arith.constant dense<0x7F800000> : vector<1xf32>
    %245 = vector.multi_reduction <minimumf>, %244, %cst_88 [1, 2] : vector<1x16x16xf32> to vector<1xf32>
    %246 = vector.shape_cast %245 : vector<1xf32> to vector<1x1x1xf32>
    %cst_89 = arith.constant dense<0xFF800000> : vector<1xf32>
    %247 = vector.multi_reduction <maximumf>, %244, %cst_89 [1, 2] : vector<1x16x16xf32> to vector<1xf32>
    %248 = vector.shape_cast %247 : vector<1xf32> to vector<1x1x1xf32>
    %249 = arith.subf %248, %246 : vector<1x1x1xf32>
    %cst_90 = arith.constant 0.000000e+00 : f32
    %250 = vector.broadcast %cst_90 : f32 to vector<1x1x1xf32>
    %251 = arith.cmpf one, %249, %250 : vector<1x1x1xf32>
    %cst_91 = arith.constant 1.000000e+00 : f32
    %252 = vector.broadcast %cst_91 : f32 to vector<1x1x1xf32>
    %253 = arith.select %251, %249, %252 : vector<1x1x1xi1>, vector<1x1x1xf32>
    %cst_92 = arith.constant 1.000000e+00 : f32
    %254 = vector.broadcast %cst_92 : f32 to vector<1x1x1xf32>
    %255 = arith.divf %254, %253 : vector<1x1x1xf32>
    %cst_93 = arith.constant 0.000000e+00 : f32
    %256 = vector.broadcast %cst_93 : f32 to vector<1x1x1xf32>
    %257 = arith.select %251, %246, %256 : vector<1x1x1xi1>, vector<1x1x1xf32>
    %258 = vector.broadcast %257 : vector<1x1x1xf32> to vector<1x16x16xf32>
    %259 = arith.subf %244, %258 : vector<1x16x16xf32>
    %260 = vector.broadcast %255 : vector<1x1x1xf32> to vector<1x16x16xf32>
    %261 = arith.mulf %259, %260 : vector<1x16x16xf32>
    %262 = vector.shape_cast %261 : vector<1x16x16xf32> to vector<1x1x16x16xf32>
    %cst_94 = arith.constant dense<0.000000e+00> : vector<1xf32>
    %263 = vector.multi_reduction <add>, %262, %cst_94 [1, 2, 3] : vector<1x1x16x16xf32> to vector<1xf32>
    %264 = vector.shape_cast %263 : vector<1xf32> to vector<1x1x1x1xf32>
    %265 = vector.extract %264[0, 0, 0, 0] : f32 from vector<1x1x1x1xf32>
    %cst_95 = arith.constant 3.600000e+01 : f32
    %266 = arith.mulf %cst_95, %265 : f32
    %267 = arith.addf %226, %266 : f32
    %c15_i32_96 = arith.constant 15 : i32
    %268 = tpu.dynamic_rotate %261 by %c15_i32_96 dim 1 : vector<1x16x16xf32>, i32 -> vector<1x16x16xf32>
    %269 = arith.mulf %268, %9 : vector<1x16x16xf32>
    %c1_i32_97 = arith.constant 1 : i32
    %270 = tpu.dynamic_rotate %261 by %c1_i32_97 dim 1 : vector<1x16x16xf32>, i32 -> vector<1x16x16xf32>
    %271 = arith.mulf %270, %13 : vector<1x16x16xf32>
    %c15_i32_98 = arith.constant 15 : i32
    %272 = tpu.dynamic_rotate %261 by %c15_i32_98 dim 2 : vector<1x16x16xf32>, i32 -> vector<1x16x16xf32>
    %273 = arith.mulf %272, %17 : vector<1x16x16xf32>
    %c1_i32_99 = arith.constant 1 : i32
    %274 = tpu.dynamic_rotate %261 by %c1_i32_99 dim 2 : vector<1x16x16xf32>, i32 -> vector<1x16x16xf32>
    %275 = arith.mulf %274, %21 : vector<1x16x16xf32>
    %276 = arith.addf %261, %269 : vector<1x16x16xf32>
    %277 = arith.addf %276, %271 : vector<1x16x16xf32>
    %278 = arith.addf %277, %273 : vector<1x16x16xf32>
    %279 = arith.addf %278, %275 : vector<1x16x16xf32>
    %cst_100 = arith.constant 2.000000e-01 : f32
    %280 = vector.broadcast %cst_100 : f32 to vector<1x16x16xf32>
    %281 = arith.mulf %280, %279 : vector<1x16x16xf32>
    %cst_101 = arith.constant 5.000000e-01 : f32
    %282 = vector.broadcast %cst_101 : f32 to vector<1x16x16xf32>
    %283 = arith.subf %281, %282 : vector<1x16x16xf32>
    %cst_102 = arith.constant 0.000000e+00 : f32
    %284 = vector.broadcast %cst_102 : f32 to vector<1x16x16xf32>
    %285 = arith.maximumf %283, %284 : vector<1x16x16xf32>
    %cst_103 = arith.constant dense<0x7F800000> : vector<1xf32>
    %286 = vector.multi_reduction <minimumf>, %285, %cst_103 [1, 2] : vector<1x16x16xf32> to vector<1xf32>
    %287 = vector.shape_cast %286 : vector<1xf32> to vector<1x1x1xf32>
    %cst_104 = arith.constant dense<0xFF800000> : vector<1xf32>
    %288 = vector.multi_reduction <maximumf>, %285, %cst_104 [1, 2] : vector<1x16x16xf32> to vector<1xf32>
    %289 = vector.shape_cast %288 : vector<1xf32> to vector<1x1x1xf32>
    %290 = arith.subf %289, %287 : vector<1x1x1xf32>
    %cst_105 = arith.constant 0.000000e+00 : f32
    %291 = vector.broadcast %cst_105 : f32 to vector<1x1x1xf32>
    %292 = arith.cmpf one, %290, %291 : vector<1x1x1xf32>
    %cst_106 = arith.constant 1.000000e+00 : f32
    %293 = vector.broadcast %cst_106 : f32 to vector<1x1x1xf32>
    %294 = arith.select %292, %290, %293 : vector<1x1x1xi1>, vector<1x1x1xf32>
    %cst_107 = arith.constant 1.000000e+00 : f32
    %295 = vector.broadcast %cst_107 : f32 to vector<1x1x1xf32>
    %296 = arith.divf %295, %294 : vector<1x1x1xf32>
    %cst_108 = arith.constant 0.000000e+00 : f32
    %297 = vector.broadcast %cst_108 : f32 to vector<1x1x1xf32>
    %298 = arith.select %292, %287, %297 : vector<1x1x1xi1>, vector<1x1x1xf32>
    %299 = vector.broadcast %298 : vector<1x1x1xf32> to vector<1x16x16xf32>
    %300 = arith.subf %285, %299 : vector<1x16x16xf32>
    %301 = vector.broadcast %296 : vector<1x1x1xf32> to vector<1x16x16xf32>
    %302 = arith.mulf %300, %301 : vector<1x16x16xf32>
    %303 = vector.shape_cast %302 : vector<1x16x16xf32> to vector<1x1x16x16xf32>
    %cst_109 = arith.constant dense<0.000000e+00> : vector<1xf32>
    %304 = vector.multi_reduction <add>, %303, %cst_109 [1, 2, 3] : vector<1x1x16x16xf32> to vector<1xf32>
    %305 = vector.shape_cast %304 : vector<1xf32> to vector<1x1x1x1xf32>
    %306 = vector.extract %305[0, 0, 0, 0] : f32 from vector<1x1x1x1xf32>
    %cst_110 = arith.constant 4.900000e+01 : f32
    %307 = arith.mulf %cst_110, %306 : f32
    %308 = arith.addf %267, %307 : f32
    %c15_i32_111 = arith.constant 15 : i32
    %309 = tpu.dynamic_rotate %302 by %c15_i32_111 dim 1 : vector<1x16x16xf32>, i32 -> vector<1x16x16xf32>
    %310 = arith.mulf %309, %9 : vector<1x16x16xf32>
    %c1_i32_112 = arith.constant 1 : i32
    %311 = tpu.dynamic_rotate %302 by %c1_i32_112 dim 1 : vector<1x16x16xf32>, i32 -> vector<1x16x16xf32>
    %312 = arith.mulf %311, %13 : vector<1x16x16xf32>
    %c15_i32_113 = arith.constant 15 : i32
    %313 = tpu.dynamic_rotate %302 by %c15_i32_113 dim 2 : vector<1x16x16xf32>, i32 -> vector<1x16x16xf32>
    %314 = arith.mulf %313, %17 : vector<1x16x16xf32>
    %c1_i32_114 = arith.constant 1 : i32
    %315 = tpu.dynamic_rotate %302 by %c1_i32_114 dim 2 : vector<1x16x16xf32>, i32 -> vector<1x16x16xf32>
    %316 = arith.mulf %315, %21 : vector<1x16x16xf32>
    %317 = arith.addf %302, %310 : vector<1x16x16xf32>
    %318 = arith.addf %317, %312 : vector<1x16x16xf32>
    %319 = arith.addf %318, %314 : vector<1x16x16xf32>
    %320 = arith.addf %319, %316 : vector<1x16x16xf32>
    %cst_115 = arith.constant 2.000000e-01 : f32
    %321 = vector.broadcast %cst_115 : f32 to vector<1x16x16xf32>
    %322 = arith.mulf %321, %320 : vector<1x16x16xf32>
    %cst_116 = arith.constant 5.000000e-01 : f32
    %323 = vector.broadcast %cst_116 : f32 to vector<1x16x16xf32>
    %324 = arith.subf %322, %323 : vector<1x16x16xf32>
    %cst_117 = arith.constant 0.000000e+00 : f32
    %325 = vector.broadcast %cst_117 : f32 to vector<1x16x16xf32>
    %326 = arith.maximumf %324, %325 : vector<1x16x16xf32>
    %cst_118 = arith.constant dense<0x7F800000> : vector<1xf32>
    %327 = vector.multi_reduction <minimumf>, %326, %cst_118 [1, 2] : vector<1x16x16xf32> to vector<1xf32>
    %328 = vector.shape_cast %327 : vector<1xf32> to vector<1x1x1xf32>
    %cst_119 = arith.constant dense<0xFF800000> : vector<1xf32>
    %329 = vector.multi_reduction <maximumf>, %326, %cst_119 [1, 2] : vector<1x16x16xf32> to vector<1xf32>
    %330 = vector.shape_cast %329 : vector<1xf32> to vector<1x1x1xf32>
    %331 = arith.subf %330, %328 : vector<1x1x1xf32>
    %cst_120 = arith.constant 0.000000e+00 : f32
    %332 = vector.broadcast %cst_120 : f32 to vector<1x1x1xf32>
    %333 = arith.cmpf one, %331, %332 : vector<1x1x1xf32>
    %cst_121 = arith.constant 1.000000e+00 : f32
    %334 = vector.broadcast %cst_121 : f32 to vector<1x1x1xf32>
    %335 = arith.select %333, %331, %334 : vector<1x1x1xi1>, vector<1x1x1xf32>
    %cst_122 = arith.constant 1.000000e+00 : f32
    %336 = vector.broadcast %cst_122 : f32 to vector<1x1x1xf32>
    %337 = arith.divf %336, %335 : vector<1x1x1xf32>
    %cst_123 = arith.constant 0.000000e+00 : f32
    %338 = vector.broadcast %cst_123 : f32 to vector<1x1x1xf32>
    %339 = arith.select %333, %328, %338 : vector<1x1x1xi1>, vector<1x1x1xf32>
    %340 = vector.broadcast %339 : vector<1x1x1xf32> to vector<1x16x16xf32>
    %341 = arith.subf %326, %340 : vector<1x16x16xf32>
    %342 = vector.broadcast %337 : vector<1x1x1xf32> to vector<1x16x16xf32>
    %343 = arith.mulf %341, %342 : vector<1x16x16xf32>
    %344 = vector.shape_cast %343 : vector<1x16x16xf32> to vector<1x1x16x16xf32>
    %cst_124 = arith.constant dense<0.000000e+00> : vector<1xf32>
    %345 = vector.multi_reduction <add>, %344, %cst_124 [1, 2, 3] : vector<1x1x16x16xf32> to vector<1xf32>
    %346 = vector.shape_cast %345 : vector<1xf32> to vector<1x1x1x1xf32>
    %347 = vector.extract %346[0, 0, 0, 0] : f32 from vector<1x1x1x1xf32>
    %cst_125 = arith.constant 6.400000e+01 : f32
    %348 = arith.mulf %cst_125, %347 : f32
    %349 = arith.addf %308, %348 : f32
    %c15_i32_126 = arith.constant 15 : i32
    %350 = tpu.dynamic_rotate %343 by %c15_i32_126 dim 1 : vector<1x16x16xf32>, i32 -> vector<1x16x16xf32>
    %351 = arith.mulf %350, %9 : vector<1x16x16xf32>
    %c1_i32_127 = arith.constant 1 : i32
    %352 = tpu.dynamic_rotate %343 by %c1_i32_127 dim 1 : vector<1x16x16xf32>, i32 -> vector<1x16x16xf32>
    %353 = arith.mulf %352, %13 : vector<1x16x16xf32>
    %c15_i32_128 = arith.constant 15 : i32
    %354 = tpu.dynamic_rotate %343 by %c15_i32_128 dim 2 : vector<1x16x16xf32>, i32 -> vector<1x16x16xf32>
    %355 = arith.mulf %354, %17 : vector<1x16x16xf32>
    %c1_i32_129 = arith.constant 1 : i32
    %356 = tpu.dynamic_rotate %343 by %c1_i32_129 dim 2 : vector<1x16x16xf32>, i32 -> vector<1x16x16xf32>
    %357 = arith.mulf %356, %21 : vector<1x16x16xf32>
    %358 = arith.addf %343, %351 : vector<1x16x16xf32>
    %359 = arith.addf %358, %353 : vector<1x16x16xf32>
    %360 = arith.addf %359, %355 : vector<1x16x16xf32>
    %361 = arith.addf %360, %357 : vector<1x16x16xf32>
    %cst_130 = arith.constant 2.000000e-01 : f32
    %362 = vector.broadcast %cst_130 : f32 to vector<1x16x16xf32>
    %363 = arith.mulf %362, %361 : vector<1x16x16xf32>
    %cst_131 = arith.constant 5.000000e-01 : f32
    %364 = vector.broadcast %cst_131 : f32 to vector<1x16x16xf32>
    %365 = arith.subf %363, %364 : vector<1x16x16xf32>
    %cst_132 = arith.constant 0.000000e+00 : f32
    %366 = vector.broadcast %cst_132 : f32 to vector<1x16x16xf32>
    %367 = arith.maximumf %365, %366 : vector<1x16x16xf32>
    %cst_133 = arith.constant dense<0x7F800000> : vector<1xf32>
    %368 = vector.multi_reduction <minimumf>, %367, %cst_133 [1, 2] : vector<1x16x16xf32> to vector<1xf32>
    %369 = vector.shape_cast %368 : vector<1xf32> to vector<1x1x1xf32>
    %cst_134 = arith.constant dense<0xFF800000> : vector<1xf32>
    %370 = vector.multi_reduction <maximumf>, %367, %cst_134 [1, 2] : vector<1x16x16xf32> to vector<1xf32>
    %371 = vector.shape_cast %370 : vector<1xf32> to vector<1x1x1xf32>
    %372 = arith.subf %371, %369 : vector<1x1x1xf32>
    %cst_135 = arith.constant 0.000000e+00 : f32
    %373 = vector.broadcast %cst_135 : f32 to vector<1x1x1xf32>
    %374 = arith.cmpf one, %372, %373 : vector<1x1x1xf32>
    %cst_136 = arith.constant 1.000000e+00 : f32
    %375 = vector.broadcast %cst_136 : f32 to vector<1x1x1xf32>
    %376 = arith.select %374, %372, %375 : vector<1x1x1xi1>, vector<1x1x1xf32>
    %cst_137 = arith.constant 1.000000e+00 : f32
    %377 = vector.broadcast %cst_137 : f32 to vector<1x1x1xf32>
    %378 = arith.divf %377, %376 : vector<1x1x1xf32>
    %cst_138 = arith.constant 0.000000e+00 : f32
    %379 = vector.broadcast %cst_138 : f32 to vector<1x1x1xf32>
    %380 = arith.select %374, %369, %379 : vector<1x1x1xi1>, vector<1x1x1xf32>
    %381 = vector.broadcast %380 : vector<1x1x1xf32> to vector<1x16x16xf32>
    %382 = arith.subf %367, %381 : vector<1x16x16xf32>
    %383 = vector.broadcast %378 : vector<1x1x1xf32> to vector<1x16x16xf32>
    %384 = arith.mulf %382, %383 : vector<1x16x16xf32>
    %385 = vector.shape_cast %384 : vector<1x16x16xf32> to vector<1x1x16x16xf32>
    %cst_139 = arith.constant dense<0.000000e+00> : vector<1xf32>
    %386 = vector.multi_reduction <add>, %385, %cst_139 [1, 2, 3] : vector<1x1x16x16xf32> to vector<1xf32>
    %387 = vector.shape_cast %386 : vector<1xf32> to vector<1x1x1x1xf32>
    %388 = vector.extract %387[0, 0, 0, 0] : f32 from vector<1x1x1x1xf32>
    %cst_140 = arith.constant 8.100000e+01 : f32
    %389 = arith.mulf %cst_140, %388 : f32
    %390 = arith.addf %349, %389 : f32
    %c15_i32_141 = arith.constant 15 : i32
    %391 = tpu.dynamic_rotate %384 by %c15_i32_141 dim 1 : vector<1x16x16xf32>, i32 -> vector<1x16x16xf32>
    %392 = arith.mulf %391, %9 : vector<1x16x16xf32>
    %c1_i32_142 = arith.constant 1 : i32
    %393 = tpu.dynamic_rotate %384 by %c1_i32_142 dim 1 : vector<1x16x16xf32>, i32 -> vector<1x16x16xf32>
    %394 = arith.mulf %393, %13 : vector<1x16x16xf32>
    %c15_i32_143 = arith.constant 15 : i32
    %395 = tpu.dynamic_rotate %384 by %c15_i32_143 dim 2 : vector<1x16x16xf32>, i32 -> vector<1x16x16xf32>
    %396 = arith.mulf %395, %17 : vector<1x16x16xf32>
    %c1_i32_144 = arith.constant 1 : i32
    %397 = tpu.dynamic_rotate %384 by %c1_i32_144 dim 2 : vector<1x16x16xf32>, i32 -> vector<1x16x16xf32>
    %398 = arith.mulf %397, %21 : vector<1x16x16xf32>
    %399 = arith.addf %384, %392 : vector<1x16x16xf32>
    %400 = arith.addf %399, %394 : vector<1x16x16xf32>
    %401 = arith.addf %400, %396 : vector<1x16x16xf32>
    %402 = arith.addf %401, %398 : vector<1x16x16xf32>
    %cst_145 = arith.constant 2.000000e-01 : f32
    %403 = vector.broadcast %cst_145 : f32 to vector<1x16x16xf32>
    %404 = arith.mulf %403, %402 : vector<1x16x16xf32>
    %cst_146 = arith.constant 5.000000e-01 : f32
    %405 = vector.broadcast %cst_146 : f32 to vector<1x16x16xf32>
    %406 = arith.subf %404, %405 : vector<1x16x16xf32>
    %cst_147 = arith.constant 0.000000e+00 : f32
    %407 = vector.broadcast %cst_147 : f32 to vector<1x16x16xf32>
    %408 = arith.maximumf %406, %407 : vector<1x16x16xf32>
    %cst_148 = arith.constant dense<0x7F800000> : vector<1xf32>
    %409 = vector.multi_reduction <minimumf>, %408, %cst_148 [1, 2] : vector<1x16x16xf32> to vector<1xf32>
    %410 = vector.shape_cast %409 : vector<1xf32> to vector<1x1x1xf32>
    %cst_149 = arith.constant dense<0xFF800000> : vector<1xf32>
    %411 = vector.multi_reduction <maximumf>, %408, %cst_149 [1, 2] : vector<1x16x16xf32> to vector<1xf32>
    %412 = vector.shape_cast %411 : vector<1xf32> to vector<1x1x1xf32>
    %413 = arith.subf %412, %410 : vector<1x1x1xf32>
    %cst_150 = arith.constant 0.000000e+00 : f32
    %414 = vector.broadcast %cst_150 : f32 to vector<1x1x1xf32>
    %415 = arith.cmpf one, %413, %414 : vector<1x1x1xf32>
    %cst_151 = arith.constant 1.000000e+00 : f32
    %416 = vector.broadcast %cst_151 : f32 to vector<1x1x1xf32>
    %417 = arith.select %415, %413, %416 : vector<1x1x1xi1>, vector<1x1x1xf32>
    %cst_152 = arith.constant 1.000000e+00 : f32
    %418 = vector.broadcast %cst_152 : f32 to vector<1x1x1xf32>
    %419 = arith.divf %418, %417 : vector<1x1x1xf32>
    %cst_153 = arith.constant 0.000000e+00 : f32
    %420 = vector.broadcast %cst_153 : f32 to vector<1x1x1xf32>
    %421 = arith.select %415, %410, %420 : vector<1x1x1xi1>, vector<1x1x1xf32>
    %422 = vector.broadcast %421 : vector<1x1x1xf32> to vector<1x16x16xf32>
    %423 = arith.subf %408, %422 : vector<1x16x16xf32>
    %424 = vector.broadcast %419 : vector<1x1x1xf32> to vector<1x16x16xf32>
    %425 = arith.mulf %423, %424 : vector<1x16x16xf32>
    %426 = vector.shape_cast %425 : vector<1x16x16xf32> to vector<1x1x16x16xf32>
    %cst_154 = arith.constant dense<0.000000e+00> : vector<1xf32>
    %427 = vector.multi_reduction <add>, %426, %cst_154 [1, 2, 3] : vector<1x1x16x16xf32> to vector<1xf32>
    %428 = vector.shape_cast %427 : vector<1xf32> to vector<1x1x1x1xf32>
    %429 = vector.extract %428[0, 0, 0, 0] : f32 from vector<1x1x1x1xf32>
    %cst_155 = arith.constant 1.000000e+02 : f32
    %430 = arith.mulf %cst_155, %429 : f32
    %431 = arith.addf %390, %430 : f32
    %432 = vector.broadcast %431 : f32 to vector<1x1x1xf32>
    %c0_156 = arith.constant 0 : index
    %c0_157 = arith.constant 0 : index
    %c0_158 = arith.constant 0 : index
    %433 = vector.load %arg3[%c0_156, %c0_157, %c0_158] : memref<1x1x1xf32, #tpu.memory_space<vmem>>, vector<1x1x1xf32>
    tpu.vector_store %arg3[%c0_156, %c0_157, %c0_158], %432 {strides = array<i32>} : memref<1x1x1xf32, #tpu.memory_space<vmem>>, vector<1x1x1xf32>,
    return
  }
  func.func @transform_0(%arg0: i32) -> (i32, i32, i32) {
    %c0_i32 = arith.constant 0 : i32
    %c0_i32_0 = arith.constant 0 : i32
    %c0_i32_1 = arith.constant 0 : i32
    return %arg0, %c0_i32, %c0_i32_0 : i32, i32, i32
  }
  func.func @transform_1(%arg0: i32) -> (i32, i32, i32) {
    %c0_i32 = arith.constant 0 : i32
    %c0_i32_0 = arith.constant 0 : i32
    %c0_i32_1 = arith.constant 0 : i32
    return %arg0, %c0_i32, %c0_i32_0 : i32, i32, i32
  }
  func.func @transform_2(%arg0: i32) -> (i32, i32, i32) {
    %c0_i32 = arith.constant 0 : i32
    %c0_i32_0 = arith.constant 0 : i32
    %c0_i32_1 = arith.constant 0 : i32
    return %arg0, %c0_i32, %c0_i32_0 : i32, i32, i32
  }
}

</mosaic_0001>

<llo_original>
// kernel: tpu_custom_call.1
$region0: #{tpu_custom_call.1}
  #allocation0 [shape = 'u32[]', space=smem, size = 0x4, offset = 0x4, fixed_abs, tag = 'smem constant byte address 0x4 - core index']
  #allocation1 [shape = 'u32[144,128]{1,0:T(1,128)}', space=vmem, size = 0x12000, scoped, tag = 'internal scratch']
  %s0 = inlined_call_operand.hbm [shape: f32[2,16,16], index: 0, kind: input, shape index: {}]
  %s1 = inlined_call_operand.hbm [shape: f32[2,16,16], index: 1, kind: input, shape index: {}]
  %s2 = inlined_call_operand.vmem [shape: f32[2,1,1], index: 2, kind: output, shape index: {}]
  %s3 = sld [smem:[#allocation0]]
  $region49: #{tpu_custom_call.1} parent=0
    _
  %s5 = ssub.s32 1, %s3
  %s6 = scalar_select 0, %s5, %s3
  $region1: #{tpu_custom_call.1} parent=0
    #allocation2 [shape = 'u8[16384]{0}', space=vmem, size = 0x4000, scoped, tag = 'input window, operand 0']
    #allocation3 [shape = 's32[2]{0}', space=sflag, size = 0x8, scoped, tag = 'scoped memory for tpu_custom_call.1']
    #allocation4 [shape = 'u8[16384]{0}', space=vmem, size = 0x4000, scoped, tag = 'input window, operand 1']
    #allocation5 [shape = 's32[2]{0}', space=sflag, size = 0x8, scoped, tag = 'scoped memory for tpu_custom_call.1']
    %7 = vsyncpa [#allocation3], 0
    %s8 = scalar_lea.sflag [#allocation3], 1
    %9 = vsyncpa %s8, 0
    %10 = vsyncpa [#allocation5], 0
    %s11 = scalar_lea.sflag [#allocation5], 1
    %12 = vsyncpa %s11, 0
    loop: start=0, step=1, limit=4
    $region2: #{tpu_custom_call.1} parent=1 // loop_pre_header
      _
    $region3: #{tpu_custom_call.1} parent=1 // loop_header
      %s14 = sphi 0, %s18
      %p15 = scmp.ge.s32.totalorder %s14, 4
      %s24 = sphi 0, %s26
      %s27 = sphi 0, %s24
      %s28 = sphi 0, %s27
      %s44 = sphi 0, %s28
      %s50 = sphi 0, %s52
      %s53 = sphi 0, %s50
      %s54 = sphi 0, %s53
      %s70 = sphi 0, %s54
      %s76 = sphi 0, %s78
      %s79 = sphi 0, %s76
      %s80 = sphi 0, %s79
      %s96 = sphi 0, %s80
    $region4: #{tpu_custom_call.1} parent=1 // loop_header_branch
      %17 = sbr.rel (%p15) target = $region8
    $region5: #{tpu_custom_call.1} parent=1 // loop_body
      %s19 = ssub.s32 %s14, 1
      %s20 = ssub.s32 %s14, 2
      %s21 = sadd.s32 %s14, 1
      %s22 = ssub.s32 %s14, %s21
      %p23 = scmp.eq.s32.totalorder %s22, 0
      %s25 = sadd.s32 %s24, 1
      %s26 = scalar_select %p23, %s24, %s25
      %p29 = pneg %p23
      %p30 = scmp.eq.s32.totalorder %s14, 1
      %p31 = por %p29, %p30
      %p32 = scmp.ne.s32.totalorder %s24, %s27
      %p33 = scmp.eq.s32.totalorder %s14, 0
      %p34 = por %p32, %p33
      %p35 = scmp.ne.s32.totalorder %s24, %s27
      %p36 = scmp.eq.s32.totalorder %s19, 1
      %p37 = por %p35, %p36
      %p38 = scmp.ne.s32.totalorder %s27, %s28
      %p39 = scmp.eq.s32.totalorder %s19, 0
      %p40 = por %p38, %p39
      %p41 = scmp.ne.s32.totalorder %s27, %s28
      %p42 = scmp.eq.s32.totalorder %s20, 1
      %p43 = por %p41, %p42
      %p45 = scmp.ne.s32.totalorder %s28, %s44
      %p46 = scmp.eq.s32.totalorder %s20, 0
      %p47 = por %p45, %p46
      %s48 = ssub.s32 %s14, %s21
      %p49 = scmp.eq.s32.totalorder %s48, 0
      %s51 = sadd.s32 %s50, 1
      %s52 = scalar_select %p49, %s50, %s51
      %p55 = pneg %p49
      %p56 = scmp.eq.s32.totalorder %s14, 1
      %p57 = por %p55, %p56
      %p58 = scmp.ne.s32.totalorder %s50, %s53
      %p59 = scmp.eq.s32.totalorder %s14, 0
      %p60 = por %p58, %p59
      %p61 = scmp.ne.s32.totalorder %s50, %s53
      %p62 = scmp.eq.s32.totalorder %s19, 1
      %p63 = por %p61, %p62
      %p64 = scmp.ne.s32.totalorder %s53, %s54
      %p65 = scmp.eq.s32.totalorder %s19, 0
      %p66 = por %p64, %p65
      %p67 = scmp.ne.s32.totalorder %s53, %s54
      %p68 = scmp.eq.s32.totalorder %s20, 1
      %p69 = por %p67, %p68
      %p71 = scmp.ne.s32.totalorder %s54, %s70
      %p72 = scmp.eq.s32.totalorder %s20, 0
      %p73 = por %p71, %p72
      %s74 = ssub.s32 %s14, %s21
      %p75 = scmp.eq.s32.totalorder %s74, 0
      %s77 = sadd.s32 %s76, 1
      %s78 = scalar_select %p75, %s76, %s77
      %p81 = pneg %p75
      %p82 = scmp.eq.s32.totalorder %s14, 1
      %p83 = por %p81, %p82
      %p84 = scmp.ne.s32.totalorder %s76, %s79
      %p85 = scmp.eq.s32.totalorder %s14, 0
      %p86 = por %p84, %p85
      %p87 = scmp.ne.s32.totalorder %s76, %s79
      %p88 = scmp.eq.s32.totalorder %s19, 1
      %p89 = por %p87, %p88
      %p90 = scmp.ne.s32.totalorder %s79, %s80
      %p91 = scmp.eq.s32.totalorder %s19, 0
      %p92 = por %p90, %p91
      %p93 = scmp.ne.s32.totalorder %s79, %s80
      %p94 = scmp.eq.s32.totalorder %s20, 1
      %p95 = por %p93, %p94
      %p97 = scmp.ne.s32.totalorder %s80, %s96
      %p98 = scmp.eq.s32.totalorder %s20, 0
      %p99 = por %p97, %p98
      %p100 = scmp.le.s32.totalorder 1, %s14
      %p101 = scmp.lt.s32.totalorder %s14, 3
      %p102 = pnand %p100, %p101
      %p103 = pneg %p102
      // Predicated region
      $region9: #{tpu_custom_call.1} parent=5 // pred_check
        _
      $region10: #{tpu_custom_call.1} parent=5 // pred_check_branch
        %105 = sbr.rel (%p102) target = $region12
      $region11: #{tpu_custom_call.1} parent=5 // pred_region
        %s106 = ssub.s32 %s14, 1
      $region12: #{tpu_custom_call.1} parent=5 // pred_fallthru
        _
      %p107 = scmp.lt.s32.totalorder %s14, 2
      // Predicated region
      $region13: #{tpu_custom_call.1} parent=5 // pred_check
        %p108 = pneg %p107
      $region14: #{tpu_custom_call.1} parent=5 // pred_check_branch
        %110 = sbr.rel (%p108) target = $region16
      $region15: #{tpu_custom_call.1} parent=5 // pred_region
        // Predicated region
        $region17: #{tpu_custom_call.1} parent=15 // pred_check
          %p111 = pneg %p34
        $region18: #{tpu_custom_call.1} parent=15 // pred_check_branch
          %113 = sbr.rel (%p111) target = $region20
        $region19: #{tpu_custom_call.1} parent=15 // pred_region
          %s114 = sand.u32 %s24, 1
          %s115 = scalar_lea.sflag [#allocation3], %s114
          %s116 = sand.u32 %s24, 1
          %s117 = smul.addr %s116, 16
          %s118 = scalar_lea.vmem [#allocation2], %s117
          %s120 = ssub.s32 256, 256
          %121 = vsyncadd %s115, %s120
          %s122 = smul.addr %s14, 2
          %s123 = smul.addr %s122, 128
          %s124 = scalar_lea.hbm %s0, %s123
          %s125 = sshll.u32 %s118, 4
          %s126 = int_to_ptr.vmem [resolvable:$true] %s125
          %131 = dma.hbm_to_vmem [thread:$0]  %s124, 256, %s126, %s115, 128, 128, 8
        $region20: #{tpu_custom_call.1} parent=15 // pred_fallthru
          _
        // Predicated region
        $region21: #{tpu_custom_call.1} parent=15 // pred_check
          %p132 = pneg %p60
        $region22: #{tpu_custom_call.1} parent=15 // pred_check_branch
          %134 = sbr.rel (%p132) target = $region24
        $region23: #{tpu_custom_call.1} parent=15 // pred_region
          %s135 = sand.u32 %s50, 1
          %s136 = scalar_lea.sflag [#allocation5], %s135
          %s137 = sand.u32 %s50, 1
          %s138 = smul.addr %s137, 16
          %s139 = scalar_lea.vmem [#allocation4], %s138
          %s141 = ssub.s32 256, 256
          %142 = vsyncadd %s136, %s141
          %s143 = smul.addr %s14, 2
          %s144 = smul.addr %s143, 128
          %s145 = scalar_lea.hbm %s1, %s144
          %s146 = sshll.u32 %s139, 4
          %s147 = int_to_ptr.vmem [resolvable:$true] %s146
          %152 = dma.hbm_to_vmem [thread:$0]  %s145, 256, %s147, %s136, 128, 128, 8
        $region24: #{tpu_custom_call.1} parent=15 // pred_fallthru
          _
      $region16: #{tpu_custom_call.1} parent=5 // pred_fallthru
        _
      %p153 = scmp.le.s32.totalorder 1, %s14
      %p154 = scmp.lt.s32.totalorder %s14, 3
      %p155 = pnand %p153, %p154
      %p156 = pneg %p155
      // Predicated region
      $region25: #{tpu_custom_call.1} parent=5 // pred_check
        _
      $region26: #{tpu_custom_call.1} parent=5 // pred_check_branch
        %158 = sbr.rel (%p155) target = $region28
      $region27: #{tpu_custom_call.1} parent=5 // pred_region
        %s159 = ssub.s32 %s14, 1
        %s160 = sand.u32 %s27, 1
        %s161 = scalar_lea.sflag [#allocation3], %s160
        %s162 = sand.u32 %s27, 1
        %s163 = smul.addr %s162, 16
        %s164 = scalar_lea.vmem [#allocation2], %s163
        // Predicated region
        $region29: #{tpu_custom_call.1} parent=27 // pred_check
          %p165 = pneg %p40
        $region30: #{tpu_custom_call.1} parent=27 // pred_check_branch
          %167 = sbr.rel (%p165) target = $region32
        $region31: #{tpu_custom_call.1} parent=27 // pred_region
          %168 = dma.done %s161, 256
        $region32: #{tpu_custom_call.1} parent=27 // pred_fallthru
          _
        %s169 = sand.u32 %s53, 1
        %s170 = scalar_lea.sflag [#allocation5], %s169
        %s171 = sand.u32 %s53, 1
        %s172 = smul.addr %s171, 16
        %s173 = scalar_lea.vmem [#allocation4], %s172
        // Predicated region
        $region33: #{tpu_custom_call.1} parent=27 // pred_check
          %p174 = pneg %p66
        $region34: #{tpu_custom_call.1} parent=27 // pred_check_branch
          %176 = sbr.rel (%p174) target = $region36
        $region35: #{tpu_custom_call.1} parent=27 // pred_region
          %177 = dma.done %s170, 256
        $region36: #{tpu_custom_call.1} parent=27 // pred_fallthru
          _
        %s178 = sand.u32 %s27, 1
        %s179 = scalar_lea.sflag [#allocation3], %s178
        %s180 = sand.u32 %s27, 1
        %s181 = smul.addr %s180, 16
        %s182 = scalar_lea.vmem [#allocation2], %s181
        %p183 = pneg %p40
        %p184 = pneg %p37
        %s185 = sand.u32 %s53, 1
        %s186 = scalar_lea.sflag [#allocation5], %s185
        %s187 = sand.u32 %s53, 1
        %s188 = smul.addr %s187, 16
        %s189 = scalar_lea.vmem [#allocation4], %s188
        %p190 = pneg %p66
        %p191 = pneg %p63
        %p192 = pneg %p92
        %p193 = pneg %p89
        %p194 = scmp.lt.s32.totalorder %s19, 1
        %s195 = scalar_select %p194, %s19, 1
        %s196 = scalar_lea.vmem %s2, %s195
        %p197 = scmp.lt.s32.totalorder %s19, 1
        %s198 = scalar_select %p197, %s19, 1
        %s199 = scalar_lea.vmem %s2, %s198
        %v200 = vld [vmem:[%s164] sm:$0xff]
        %v201 = vld [vmem:[%s164 + $0x8] sm:$0xff]
        %v202 = vld [vmem:[%s173] sm:$0xff]
        %v203 = vld [vmem:[%s173 + $0x8] sm:$0xff]
        %v204 = vsub.f32 %v200, %v202
        %v205 = vsub.f32 %v201, %v203
        %v206 = vmul.f32 %v204, %v204
        %v207 = vmul.f32 %v205, %v205
        %v208 = vlaneseq
        %v209 = vshrl.u32 %v208, 7
        %v210 = vadd.s32 %v209, 8
        %v211 = vlaneseq
        %v212 = vand.u32 %v211, 127
        %vm213 = vcmp.ne.s32.totalorder %v209, 15
        %vm214 = vcmp.ne.s32.totalorder %v210, 15
        %v215 = vsel %vm213, 1, 0
        %v216 = vsel %vm214, 1, 0
        %v217 = vcvt.s32.f32 %v215
        %v218 = vcvt.s32.f32 %v216
        %vm219 = vcmp.ne.s32.totalorder %v209, 0
        %vm220 = vcmp.ne.s32.totalorder %v210, 0
        %v221 = vsel %vm219, 1, 0
        %v222 = vsel %vm220, 1, 0
        %v223 = vcvt.s32.f32 %v221
        %v224 = vcvt.s32.f32 %v222
        %vm225 = vcmp.ne.s32.totalorder %v212, 15
        %v226 = vsel %vm225, 1, 0
        %v227 = vcvt.s32.f32 %v226
        %vm228 = vcmp.ne.s32.totalorder %v212, 0
        %v229 = vsel %vm228, 1, 0
        %v230 = vcvt.s32.f32 %v229
        %v231 = vrot.slane %v206, 1
        %v232 = vrot.slane %v207, 1
        %vm233 = vcmp.lt.s32.totalorder %v209, 7
        %v234 = vsel %vm233, %v231, %v232
        %v235 = vsel %vm233, %v232, %v231
        %v236 = vmul.f32 %v234, %v217
        %v237 = vmul.f32 %v235, %v218
        %v238 = vrot.slane %v206, 7
        %v239 = vrot.slane %v207, 7
        %vm240 = vcmp.lt.s32.totalorder %v209, 1
        %v241 = vsel %vm240, %v238, %v239
        %v242 = vsel %vm240, %v239, %v238
        %v243 = vmul.f32 %v242, %v223
        %v244 = vmul.f32 %v241, %v224
        %vm245 = vcmask 1047680
        %246 = vrot.lane.b32.xlu0 %v206, 16
        %v247 = vpop.permute.xlu0 %246
        %v248 = vsel %vm245, %v247, %v206
        %249 = vrot.lane.b32.xlu0 %v207, 16
        %v250 = vpop.permute.xlu0 %249
        %v251 = vsel %vm245, %v250, %v207
        %252 = vrot.lane.b32.xlu0 %v248, 16
        %v253 = vpop.permute.xlu0 %252
        %254 = vrot.lane.b32.xlu0 %v251, 16
        %v255 = vpop.permute.xlu0 %254
        %v256 = vsel %vm245, %v253, %v206
        %v257 = vsel %vm245, %v255, %v207
        %259 = vrot.lane.b32.xlu0 %v227, 1
        %v260 = vpop.permute.xlu0 %259
        %v262 = vmul.f32 %v256, %v260
        %v263 = vmul.f32 %v257, %v260
        %265 = vrot.lane.b32.xlu0 %v230, 15
        %v266 = vpop.permute.xlu0 %265
        %v268 = vmul.f32 %v256, %v266
        %v269 = vmul.f32 %v257, %v266
        %v270 = vadd.f32 %v206, %v236
        %v271 = vadd.f32 %v207, %v237
        %v272 = vadd.f32 %v270, %v243
        %v273 = vadd.f32 %v271, %v244
        %276 = vrot.lane.b32.xlu0 %v262, 127
        %v277 = vpop.permute.xlu0 %276
        %278 = vrot.lane.b32.xlu0 %v263, 127
        %v279 = vpop.permute.xlu0 %278
        %v282 = vadd.f32 %v272, %v277
        %v283 = vadd.f32 %v273, %v279
        %286 = vrot.lane.b32.xlu0 %v268, 113
        %v287 = vpop.permute.xlu0 %286
        %288 = vrot.lane.b32.xlu0 %v269, 113
        %v289 = vpop.permute.xlu0 %288
        %v292 = vadd.f32 %v282, %v287
        %v293 = vadd.f32 %v283, %v289
        %v294 = vmul.f32 %v292, 0.2
        %v295 = vmul.f32 %v293, 0.2
        %v296 = vsub.f32 %v294, 0.5
        %v297 = vsub.f32 %v295, 0.5
        %v298 = vmax.f32 %v296, 0.0
        %v299 = vmax.f32 %v297, 0.0
        %vm300 = vcmask 130048
        %v301 = vsel %vm300, %v298, inf
        %v302 = vsel %vm300, %v299, inf
        %v303 = vmin.f32 %v301, %v302
        %304 = vmin.xlane.f32.xlu0 %v303
        %v305 = vpop.xlane.xlu0 %304
        %v306 = vrot.slane %v305, 4
        %v307 = vmin.f32 %v305, %v306
        %v308 = vrot.slane %v307, 2
        %v309 = vmin.f32 %v307, %v308
        %v310 = vrot.slane %v309, 1
        %v311 = vmin.f32 %v309, %v310
        %v312 = vsel %vm300, %v298, -inf
        %v313 = vsel %vm300, %v299, -inf
        %v314 = vmax.f32 %v312, %v313
        %315 = vmax.xlane.f32.xlu0 %v314
        %v316 = vpop.xlane.xlu0 %315
        %v317 = vrot.slane %v316, 4
        %v318 = vmax.f32 %v316, %v317
        %v319 = vrot.slane %v318, 2
        %v320 = vmax.f32 %v318, %v319
        %v321 = vrot.slane %v320, 1
        %v322 = vmax.f32 %v320, %v321
        %v323 = vsub.f32 %v322, %v311
        %vm324 = vcmp.ne.f32.partialorder %v323, 0.0
        %v325 = vsel %vm324, %v323, 1.0
        %v326 = vrcp.pop %v325
        %v327 = vmul.f32 1.0, %v326
        %v328 = vsel %vm324, %v311, 0.0
        %v329 = vsub.f32 %v298, %v328
        %v330 = vsub.f32 %v299, %v328
        %v331 = vmul.f32 %v329, %v327
        %v332 = vmul.f32 %v330, %v327
        %v333 = vsel %vm300, %v331, 0.0
        %v334 = vsel %vm300, %v332, 0.0
        %v335 = vadd.f32 %v333, %v334
        %336 = vadd.xlane.f32.xlu0 %v335
        %v337 = vpop.xlane.xlu0 %336
        %v338 = vrot.slane %v337, 4
        %v339 = vadd.f32 %v337, %v338
        %v340 = vrot.slane %v339, 2
        %v341 = vadd.f32 %v339, %v340
        %v342 = vrot.slane %v341, 1
        %v343 = vadd.f32 %v341, %v342
        %s344 = vtos %v343
        %s345 = sadd.f32 %s344, 0.0
        %v346 = vrot.slane %v331, 1
        %v347 = vrot.slane %v332, 1
        %v348 = vsel %vm233, %v346, %v347
        %v349 = vsel %vm233, %v347, %v346
        %v350 = vmul.f32 %v348, %v217
        %v351 = vmul.f32 %v349, %v218
        %v352 = vrot.slane %v331, 7
        %v353 = vrot.slane %v332, 7
        %v354 = vsel %vm240, %v352, %v353
        %v355 = vsel %vm240, %v353, %v352
        %v356 = vmul.f32 %v355, %v223
        %v357 = vmul.f32 %v354, %v224
        %358 = vrot.lane.b32.xlu0 %v331, 16
        %v359 = vpop.permute.xlu0 %358
        %v360 = vsel %vm245, %v359, %v331
        %361 = vrot.lane.b32.xlu0 %v332, 16
        %v362 = vpop.permute.xlu0 %361
        %v363 = vsel %vm245, %v362, %v332
        %364 = vrot.lane.b32.xlu0 %v360, 16
        %v365 = vpop.permute.xlu0 %364
        %366 = vrot.lane.b32.xlu0 %v363, 16
        %v367 = vpop.permute.xlu0 %366
        %v368 = vsel %vm245, %v365, %v331
        %v369 = vsel %vm245, %v367, %v332
        %v370 = vmul.f32 %v368, %v260
        %v371 = vmul.f32 %v369, %v260
        %v372 = vmul.f32 %v368, %v266
        %v373 = vmul.f32 %v369, %v266
        %v374 = vadd.f32 %v331, %v350
        %v375 = vadd.f32 %v332, %v351
        %v376 = vadd.f32 %v374, %v356
        %v377 = vadd.f32 %v375, %v357
        %380 = vrot.lane.b32.xlu0 %v370, 127
        %v381 = vpop.permute.xlu0 %380
        %382 = vrot.lane.b32.xlu0 %v371, 127
        %v383 = vpop.permute.xlu0 %382
        %v386 = vadd.f32 %v376, %v381
        %v387 = vadd.f32 %v377, %v383
        %390 = vrot.lane.b32.xlu0 %v372, 113
        %v391 = vpop.permute.xlu0 %390
        %392 = vrot.lane.b32.xlu0 %v373, 113
        %v393 = vpop.permute.xlu0 %392
        %v396 = vadd.f32 %v386, %v391
        %v397 = vadd.f32 %v387, %v393
        %v398 = vmul.f32 %v396, 0.2
        %v399 = vmul.f32 %v397, 0.2
        %v400 = vsub.f32 %v398, 0.5
        %v401 = vsub.f32 %v399, 0.5
        %v402 = vmax.f32 %v400, 0.0
        %v403 = vmax.f32 %v401, 0.0
        %v404 = vsel %vm300, %v402, inf
        %v405 = vsel %vm300, %v403, inf
        %v406 = vmin.f32 %v404, %v405
        %407 = vmin.xlane.f32.xlu0 %v406
        %v408 = vpop.xlane.xlu0 %407
        %v409 = vrot.slane %v408, 4
        %v410 = vmin.f32 %v408, %v409
        %v411 = vrot.slane %v410, 2
        %v412 = vmin.f32 %v410, %v411
        %v413 = vrot.slane %v412, 1
        %v414 = vmin.f32 %v412, %v413
        %v415 = vsel %vm300, %v402, -inf
        %v416 = vsel %vm300, %v403, -inf
        %v417 = vmax.f32 %v415, %v416
        %418 = vmax.xlane.f32.xlu0 %v417
        %v419 = vpop.xlane.xlu0 %418
        %v420 = vrot.slane %v419, 4
        %v421 = vmax.f32 %v419, %v420
        %v422 = vrot.slane %v421, 2
        %v423 = vmax.f32 %v421, %v422
        %v424 = vrot.slane %v423, 1
        %v425 = vmax.f32 %v423, %v424
        %v426 = vsub.f32 %v425, %v414
        %vm427 = vcmp.ne.f32.partialorder %v426, 0.0
        %v428 = vsel %vm427, %v426, 1.0
        %v429 = vrcp.pop %v428
        %v430 = vmul.f32 1.0, %v429
        %v431 = vsel %vm427, %v414, 0.0
        %v432 = vsub.f32 %v402, %v431
        %v433 = vsub.f32 %v403, %v431
        %v434 = vmul.f32 %v432, %v430
        %v435 = vmul.f32 %v433, %v430
        %v436 = vsel %vm300, %v434, 0.0
        %v437 = vsel %vm300, %v435, 0.0
        %v438 = vadd.f32 %v436, %v437
        %439 = vadd.xlane.f32.xlu0 %v438
        %v440 = vpop.xlane.xlu0 %439
        %v441 = vrot.slane %v440, 4
        %v442 = vadd.f32 %v440, %v441
        %v443 = vrot.slane %v442, 2
        %v444 = vadd.f32 %v442, %v443
        %v445 = vrot.slane %v444, 1
        %v446 = vadd.f32 %v444, %v445
        %s447 = vtos %v446
        %s448 = smul.f32 %s447, 4.0
        %s449 = sadd.f32 %s345, %s448
        %v450 = vrot.slane %v434, 1
        %v451 = vrot.slane %v435, 1
        %v452 = vsel %vm233, %v450, %v451
        %v453 = vsel %vm233, %v451, %v450
        %v454 = vmul.f32 %v452, %v217
        %v455 = vmul.f32 %v453, %v218
        %v456 = vrot.slane %v434, 7
        %v457 = vrot.slane %v435, 7
        %v458 = vsel %vm240, %v456, %v457
        %v459 = vsel %vm240, %v457, %v456
        %v460 = vmul.f32 %v459, %v223
        %v461 = vmul.f32 %v458, %v224
        %462 = vrot.lane.b32.xlu0 %v434, 16
        %v463 = vpop.permute.xlu0 %462
        %v464 = vsel %vm245, %v463, %v434
        %465 = vrot.lane.b32.xlu0 %v435, 16
        %v466 = vpop.permute.xlu0 %465
        %v467 = vsel %vm245, %v466, %v435
        %468 = vrot.lane.b32.xlu0 %v464, 16
        %v469 = vpop.permute.xlu0 %468
        %470 = vrot.lane.b32.xlu0 %v467, 16
        %v471 = vpop.permute.xlu0 %470
        %v472 = vsel %vm245, %v469, %v434
        %v473 = vsel %vm245, %v471, %v435
        %v474 = vmul.f32 %v472, %v260
        %v475 = vmul.f32 %v473, %v260
        %v476 = vmul.f32 %v472, %v266
        %v477 = vmul.f32 %v473, %v266
        %v478 = vadd.f32 %v434, %v454
        %v479 = vadd.f32 %v435, %v455
        %v480 = vadd.f32 %v478, %v460
        %v481 = vadd.f32 %v479, %v461
        %484 = vrot.lane.b32.xlu0 %v474, 127
        %v485 = vpop.permute.xlu0 %484
        %486 = vrot.lane.b32.xlu0 %v475, 127
        %v487 = vpop.permute.xlu0 %486
        %v490 = vadd.f32 %v480, %v485
        %v491 = vadd.f32 %v481, %v487
        %494 = vrot.lane.b32.xlu0 %v476, 113
        %v495 = vpop.permute.xlu0 %494
        %496 = vrot.lane.b32.xlu0 %v477, 113
        %v497 = vpop.permute.xlu0 %496
        %v500 = vadd.f32 %v490, %v495
        %v501 = vadd.f32 %v491, %v497
        %v502 = vmul.f32 %v500, 0.2
        %v503 = vmul.f32 %v501, 0.2
        %v504 = vsub.f32 %v502, 0.5
        %v505 = vsub.f32 %v503, 0.5
        %v506 = vmax.f32 %v504, 0.0
        %v507 = vmax.f32 %v505, 0.0
        %v508 = vsel %vm300, %v506, inf
        %v509 = vsel %vm300, %v507, inf
        %v510 = vmin.f32 %v508, %v509
        %511 = vmin.xlane.f32.xlu0 %v510
        %v512 = vpop.xlane.xlu0 %511
        %v513 = vrot.slane %v512, 4
        %v514 = vmin.f32 %v512, %v513
        %v515 = vrot.slane %v514, 2
        %v516 = vmin.f32 %v514, %v515
        %v517 = vrot.slane %v516, 1
        %v518 = vmin.f32 %v516, %v517
        %v519 = vsel %vm300, %v506, -inf
        %v520 = vsel %vm300, %v507, -inf
        %v521 = vmax.f32 %v519, %v520
        %522 = vmax.xlane.f32.xlu0 %v521
        %v523 = vpop.xlane.xlu0 %522
        %v524 = vrot.slane %v523, 4
        %v525 = vmax.f32 %v523, %v524
        %v526 = vrot.slane %v525, 2
        %v527 = vmax.f32 %v525, %v526
        %v528 = vrot.slane %v527, 1
        %v529 = vmax.f32 %v527, %v528
        %v530 = vsub.f32 %v529, %v518
        %vm531 = vcmp.ne.f32.partialorder %v530, 0.0
        %v532 = vsel %vm531, %v530, 1.0
        %v533 = vrcp.pop %v532
        %v534 = vmul.f32 1.0, %v533
        %v535 = vsel %vm531, %v518, 0.0
        %v536 = vsub.f32 %v506, %v535
        %v537 = vsub.f32 %v507, %v535
        %v538 = vmul.f32 %v536, %v534
        %v539 = vmul.f32 %v537, %v534
        %v540 = vsel %vm300, %v538, 0.0
        %v541 = vsel %vm300, %v539, 0.0
        %v542 = vadd.f32 %v540, %v541
        %543 = vadd.xlane.f32.xlu0 %v542
        %v544 = vpop.xlane.xlu0 %543
        %v545 = vrot.slane %v544, 4
        %v546 = vadd.f32 %v544, %v545
        %v547 = vrot.slane %v546, 2
        %v548 = vadd.f32 %v546, %v547
        %v549 = vrot.slane %v548, 1
        %v550 = vadd.f32 %v548, %v549
        %s551 = vtos %v550
        %s552 = smul.f32 %s551, 9.0
        %s553 = sadd.f32 %s449, %s552
        %v554 = vrot.slane %v538, 1
        %v555 = vrot.slane %v539, 1
        %v556 = vsel %vm233, %v554, %v555
        %v557 = vsel %vm233, %v555, %v554
        %v558 = vmul.f32 %v556, %v217
        %v559 = vmul.f32 %v557, %v218
        %v560 = vrot.slane %v538, 7
        %v561 = vrot.slane %v539, 7
        %v562 = vsel %vm240, %v560, %v561
        %v563 = vsel %vm240, %v561, %v560
        %v564 = vmul.f32 %v563, %v223
        %v565 = vmul.f32 %v562, %v224
        %566 = vrot.lane.b32.xlu0 %v538, 16
        %v567 = vpop.permute.xlu0 %566
        %v568 = vsel %vm245, %v567, %v538
        %569 = vrot.lane.b32.xlu0 %v539, 16
        %v570 = vpop.permute.xlu0 %569
        %v571 = vsel %vm245, %v570, %v539
        %572 = vrot.lane.b32.xlu0 %v568, 16
        %v573 = vpop.permute.xlu0 %572
        %574 = vrot.lane.b32.xlu0 %v571, 16
        %v575 = vpop.permute.xlu0 %574
        %v576 = vsel %vm245, %v573, %v538
        %v577 = vsel %vm245, %v575, %v539
        %v578 = vmul.f32 %v576, %v260
        %v579 = vmul.f32 %v577, %v260
        %v580 = vmul.f32 %v576, %v266
        %v581 = vmul.f32 %v577, %v266
        %v582 = vadd.f32 %v538, %v558
        %v583 = vadd.f32 %v539, %v559
        %v584 = vadd.f32 %v582, %v564
        %v585 = vadd.f32 %v583, %v565
        %588 = vrot.lane.b32.xlu0 %v578, 127
        %v589 = vpop.permute.xlu0 %588
        %590 = vrot.lane.b32.xlu0 %v579, 127
        %v591 = vpop.permute.xlu0 %590
        %v594 = vadd.f32 %v584, %v589
        %v595 = vadd.f32 %v585, %v591
        %598 = vrot.lane.b32.xlu0 %v580, 113
        %v599 = vpop.permute.xlu0 %598
        %600 = vrot.lane.b32.xlu0 %v581, 113
        %v601 = vpop.permute.xlu0 %600
        %v604 = vadd.f32 %v594, %v599
        %v605 = vadd.f32 %v595, %v601
        %v606 = vmul.f32 %v604, 0.2
        %v607 = vmul.f32 %v605, 0.2
        %v608 = vsub.f32 %v606, 0.5
        %v609 = vsub.f32 %v607, 0.5
        %v610 = vmax.f32 %v608, 0.0
        %v611 = vmax.f32 %v609, 0.0
        %v612 = vsel %vm300, %v610, inf
        %v613 = vsel %vm300, %v611, inf
        %v614 = vmin.f32 %v612, %v613
        %615 = vmin.xlane.f32.xlu0 %v614
        %v616 = vpop.xlane.xlu0 %615
        %v617 = vrot.slane %v616, 4
        %v618 = vmin.f32 %v616, %v617
        %v619 = vrot.slane %v618, 2
        %v620 = vmin.f32 %v618, %v619
        %v621 = vrot.slane %v620, 1
        %v622 = vmin.f32 %v620, %v621
        %v623 = vsel %vm300, %v610, -inf
        %v624 = vsel %vm300, %v611, -inf
        %v625 = vmax.f32 %v623, %v624
        %626 = vmax.xlane.f32.xlu0 %v625
        %v627 = vpop.xlane.xlu0 %626
        %v628 = vrot.slane %v627, 4
        %v629 = vmax.f32 %v627, %v628
        %v630 = vrot.slane %v629, 2
        %v631 = vmax.f32 %v629, %v630
        %v632 = vrot.slane %v631, 1
        %v633 = vmax.f32 %v631, %v632
        %v634 = vsub.f32 %v633, %v622
        %vm635 = vcmp.ne.f32.partialorder %v634, 0.0
        %v636 = vsel %vm635, %v634, 1.0
        %v637 = vrcp.pop %v636
        %v638 = vmul.f32 1.0, %v637
        %v639 = vsel %vm635, %v622, 0.0
        %v640 = vsub.f32 %v610, %v639
        %v641 = vsub.f32 %v611, %v639
        %v642 = vmul.f32 %v640, %v638
        %v643 = vmul.f32 %v641, %v638
        %v644 = vsel %vm300, %v642, 0.0
        %v645 = vsel %vm300, %v643, 0.0
        %v646 = vadd.f32 %v644, %v645
        %647 = vadd.xlane.f32.xlu0 %v646
        %v648 = vpop.xlane.xlu0 %647
        %v649 = vrot.slane %v648, 4
        %v650 = vadd.f32 %v648, %v649
        %v651 = vrot.slane %v650, 2
        %v652 = vadd.f32 %v650, %v651
        %v653 = vrot.slane %v652, 1
        %v654 = vadd.f32 %v652, %v653
        %s655 = vtos %v654
        %s656 = smul.f32 %s655, 16.0
        %s657 = sadd.f32 %s553, %s656
        %v658 = vrot.slane %v642, 1
        %v659 = vrot.slane %v643, 1
        %v660 = vsel %vm233, %v658, %v659
        %v661 = vsel %vm233, %v659, %v658
        %v662 = vmul.f32 %v660, %v217
        %v663 = vmul.f32 %v661, %v218
        %v664 = vrot.slane %v642, 7
        %v665 = vrot.slane %v643, 7
        %v666 = vsel %vm240, %v664, %v665
        %v667 = vsel %vm240, %v665, %v664
        %v668 = vmul.f32 %v667, %v223
        %v669 = vmul.f32 %v666, %v224
        %670 = vrot.lane.b32.xlu0 %v642, 16
        %v671 = vpop.permute.xlu0 %670
        %v672 = vsel %vm245, %v671, %v642
        %673 = vrot.lane.b32.xlu0 %v643, 16
        %v674 = vpop.permute.xlu0 %673
        %v675 = vsel %vm245, %v674, %v643
        %676 = vrot.lane.b32.xlu0 %v672, 16
        %v677 = vpop.permute.xlu0 %676
        %678 = vrot.lane.b32.xlu0 %v675, 16
        %v679 = vpop.permute.xlu0 %678
        %v680 = vsel %vm245, %v677, %v642
        %v681 = vsel %vm245, %v679, %v643
        %v682 = vmul.f32 %v680, %v260
        %v683 = vmul.f32 %v681, %v260
        %v684 = vmul.f32 %v680, %v266
        %v685 = vmul.f32 %v681, %v266
        %v686 = vadd.f32 %v642, %v662
        %v687 = vadd.f32 %v643, %v663
        %v688 = vadd.f32 %v686, %v668
        %v689 = vadd.f32 %v687, %v669
        %692 = vrot.lane.b32.xlu0 %v682, 127
        %v693 = vpop.permute.xlu0 %692
        %694 = vrot.lane.b32.xlu0 %v683, 127
        %v695 = vpop.permute.xlu0 %694
        %v698 = vadd.f32 %v688, %v693
        %v699 = vadd.f32 %v689, %v695
        %702 = vrot.lane.b32.xlu0 %v684, 113
        %v703 = vpop.permute.xlu0 %702
        %704 = vrot.lane.b32.xlu0 %v685, 113
        %v705 = vpop.permute.xlu0 %704
        %v708 = vadd.f32 %v698, %v703
        %v709 = vadd.f32 %v699, %v705
        %v710 = vmul.f32 %v708, 0.2
        %v711 = vmul.f32 %v709, 0.2
        %v712 = vsub.f32 %v710, 0.5
        %v713 = vsub.f32 %v711, 0.5
        %v714 = vmax.f32 %v712, 0.0
        %v715 = vmax.f32 %v713, 0.0
        %v716 = vsel %vm300, %v714, inf
        %v717 = vsel %vm300, %v715, inf
        %v718 = vmin.f32 %v716, %v717
        %719 = vmin.xlane.f32.xlu0 %v718
        %v720 = vpop.xlane.xlu0 %719
        %v721 = vrot.slane %v720, 4
        %v722 = vmin.f32 %v720, %v721
        %v723 = vrot.slane %v722, 2
        %v724 = vmin.f32 %v722, %v723
        %v725 = vrot.slane %v724, 1
        %v726 = vmin.f32 %v724, %v725
        %v727 = vsel %vm300, %v714, -inf
        %v728 = vsel %vm300, %v715, -inf
        %v729 = vmax.f32 %v727, %v728
        %730 = vmax.xlane.f32.xlu0 %v729
        %v731 = vpop.xlane.xlu0 %730
        %v732 = vrot.slane %v731, 4
        %v733 = vmax.f32 %v731, %v732
        %v734 = vrot.slane %v733, 2
        %v735 = vmax.f32 %v733, %v734
        %v736 = vrot.slane %v735, 1
        %v737 = vmax.f32 %v735, %v736
        %v738 = vsub.f32 %v737, %v726
        %vm739 = vcmp.ne.f32.partialorder %v738, 0.0
        %v740 = vsel %vm739, %v738, 1.0
        %v741 = vrcp.pop %v740
        %v742 = vmul.f32 1.0, %v741
        %v743 = vsel %vm739, %v726, 0.0
        %v744 = vsub.f32 %v714, %v743
        %v745 = vsub.f32 %v715, %v743
        %v746 = vmul.f32 %v744, %v742
        %v747 = vmul.f32 %v745, %v742
        %v748 = vsel %vm300, %v746, 0.0
        %v749 = vsel %vm300, %v747, 0.0
        %v750 = vadd.f32 %v748, %v749
        %751 = vadd.xlane.f32.xlu0 %v750
        %v752 = vpop.xlane.xlu0 %751
        %v753 = vrot.slane %v752, 4
        %v754 = vadd.f32 %v752, %v753
        %v755 = vrot.slane %v754, 2
        %v756 = vadd.f32 %v754, %v755
        %v757 = vrot.slane %v756, 1
        %v758 = vadd.f32 %v756, %v757
        %s759 = vtos %v758
        %s760 = smul.f32 %s759, 25.0
        %s761 = sadd.f32 %s657, %s760
        %v762 = vrot.slane %v746, 1
        %v763 = vrot.slane %v747, 1
        %v764 = vsel %vm233, %v762, %v763
        %v765 = vsel %vm233, %v763, %v762
        %v766 = vmul.f32 %v764, %v217
        %v767 = vmul.f32 %v765, %v218
        %v768 = vrot.slane %v746, 7
        %v769 = vrot.slane %v747, 7
        %v770 = vsel %vm240, %v768, %v769
        %v771 = vsel %vm240, %v769, %v768
        %v772 = vmul.f32 %v771, %v223
        %v773 = vmul.f32 %v770, %v224
        %774 = vrot.lane.b32.xlu0 %v746, 16
        %v775 = vpop.permute.xlu0 %774
        %v776 = vsel %vm245, %v775, %v746
        %777 = vrot.lane.b32.xlu0 %v747, 16
        %v778 = vpop.permute.xlu0 %777
        %v779 = vsel %vm245, %v778, %v747
        %780 = vrot.lane.b32.xlu0 %v776, 16
        %v781 = vpop.permute.xlu0 %780
        %782 = vrot.lane.b32.xlu0 %v779, 16
        %v783 = vpop.permute.xlu0 %782
        %v784 = vsel %vm245, %v781, %v746
        %v785 = vsel %vm245, %v783, %v747
        %v786 = vmul.f32 %v784, %v260
        %v787 = vmul.f32 %v785, %v260
        %v788 = vmul.f32 %v784, %v266
        %v789 = vmul.f32 %v785, %v266
        %v790 = vadd.f32 %v746, %v766
        %v791 = vadd.f32 %v747, %v767
        %v792 = vadd.f32 %v790, %v772
        %v793 = vadd.f32 %v791, %v773
        %796 = vrot.lane.b32.xlu0 %v786, 127
        %v797 = vpop.permute.xlu0 %796
        %798 = vrot.lane.b32.xlu0 %v787, 127
        %v799 = vpop.permute.xlu0 %798
        %v802 = vadd.f32 %v792, %v797
        %v803 = vadd.f32 %v793, %v799
        %806 = vrot.lane.b32.xlu0 %v788, 113
        %v807 = vpop.permute.xlu0 %806
        %808 = vrot.lane.b32.xlu0 %v789, 113
        %v809 = vpop.permute.xlu0 %808
        %v812 = vadd.f32 %v802, %v807
        %v813 = vadd.f32 %v803, %v809
        %v814 = vmul.f32 %v812, 0.2
        %v815 = vmul.f32 %v813, 0.2
        %v816 = vsub.f32 %v814, 0.5
        %v817 = vsub.f32 %v815, 0.5
        %v818 = vmax.f32 %v816, 0.0
        %v819 = vmax.f32 %v817, 0.0
        %v820 = vsel %vm300, %v818, inf
        %v821 = vsel %vm300, %v819, inf
        %v822 = vmin.f32 %v820, %v821
        %823 = vmin.xlane.f32.xlu0 %v822
        %v824 = vpop.xlane.xlu0 %823
        %v825 = vrot.slane %v824, 4
        %v826 = vmin.f32 %v824, %v825
        %v827 = vrot.slane %v826, 2
        %v828 = vmin.f32 %v826, %v827
        %v829 = vrot.slane %v828, 1
        %v830 = vmin.f32 %v828, %v829
        %v831 = vsel %vm300, %v818, -inf
        %v832 = vsel %vm300, %v819, -inf
        %v833 = vmax.f32 %v831, %v832
        %834 = vmax.xlane.f32.xlu0 %v833
        %v835 = vpop.xlane.xlu0 %834
        %v836 = vrot.slane %v835, 4
        %v837 = vmax.f32 %v835, %v836
        %v838 = vrot.slane %v837, 2
        %v839 = vmax.f32 %v837, %v838
        %v840 = vrot.slane %v839, 1
        %v841 = vmax.f32 %v839, %v840
        %v842 = vsub.f32 %v841, %v830
        %vm843 = vcmp.ne.f32.partialorder %v842, 0.0
        %v844 = vsel %vm843, %v842, 1.0
        %v845 = vrcp.pop %v844
        %v846 = vmul.f32 1.0, %v845
        %v847 = vsel %vm843, %v830, 0.0
        %v848 = vsub.f32 %v818, %v847
        %v849 = vsub.f32 %v819, %v847
        %v850 = vmul.f32 %v848, %v846
        %v851 = vmul.f32 %v849, %v846
        %v852 = vsel %vm300, %v850, 0.0
        %v853 = vsel %vm300, %v851, 0.0
        %v854 = vadd.f32 %v852, %v853
        %855 = vadd.xlane.f32.xlu0 %v854
        %v856 = vpop.xlane.xlu0 %855
        %v857 = vrot.slane %v856, 4
        %v858 = vadd.f32 %v856, %v857
        %v859 = vrot.slane %v858, 2
        %v860 = vadd.f32 %v858, %v859
        %v861 = vrot.slane %v860, 1
        %v862 = vadd.f32 %v860, %v861
        %s863 = vtos %v862
        %s864 = smul.f32 %s863, 36.0
        %s865 = sadd.f32 %s761, %s864
        %v866 = vrot.slane %v850, 1
        %v867 = vrot.slane %v851, 1
        %v868 = vsel %vm233, %v866, %v867
        %v869 = vsel %vm233, %v867, %v866
        %v870 = vmul.f32 %v868, %v217
        %v871 = vmul.f32 %v869, %v218
        %v872 = vrot.slane %v850, 7
        %v873 = vrot.slane %v851, 7
        %v874 = vsel %vm240, %v872, %v873
        %v875 = vsel %vm240, %v873, %v872
        %v876 = vmul.f32 %v875, %v223
        %v877 = vmul.f32 %v874, %v224
        %878 = vrot.lane.b32.xlu0 %v850, 16
        %v879 = vpop.permute.xlu0 %878
        %v880 = vsel %vm245, %v879, %v850
        %881 = vrot.lane.b32.xlu0 %v851, 16
        %v882 = vpop.permute.xlu0 %881
        %v883 = vsel %vm245, %v882, %v851
        %884 = vrot.lane.b32.xlu0 %v880, 16
        %v885 = vpop.permute.xlu0 %884
        %886 = vrot.lane.b32.xlu0 %v883, 16
        %v887 = vpop.permute.xlu0 %886
        %v888 = vsel %vm245, %v885, %v850
        %v889 = vsel %vm245, %v887, %v851
        %v890 = vmul.f32 %v888, %v260
        %v891 = vmul.f32 %v889, %v260
        %v892 = vmul.f32 %v888, %v266
        %v893 = vmul.f32 %v889, %v266
        %v894 = vadd.f32 %v850, %v870
        %v895 = vadd.f32 %v851, %v871
        %v896 = vadd.f32 %v894, %v876
        %v897 = vadd.f32 %v895, %v877
        %900 = vrot.lane.b32.xlu0 %v890, 127
        %v901 = vpop.permute.xlu0 %900
        %902 = vrot.lane.b32.xlu0 %v891, 127
        %v903 = vpop.permute.xlu0 %902
        %v906 = vadd.f32 %v896, %v901
        %v907 = vadd.f32 %v897, %v903
        %910 = vrot.lane.b32.xlu0 %v892, 113
        %v911 = vpop.permute.xlu0 %910
        %912 = vrot.lane.b32.xlu0 %v893, 113
        %v913 = vpop.permute.xlu0 %912
        %v916 = vadd.f32 %v906, %v911
        %v917 = vadd.f32 %v907, %v913
        %v918 = vmul.f32 %v916, 0.2
        %v919 = vmul.f32 %v917, 0.2
        %v920 = vsub.f32 %v918, 0.5
        %v921 = vsub.f32 %v919, 0.5
        %v922 = vmax.f32 %v920, 0.0
        %v923 = vmax.f32 %v921, 0.0
        %v924 = vsel %vm300, %v922, inf
        %v925 = vsel %vm300, %v923, inf
        %v926 = vmin.f32 %v924, %v925
        %927 = vmin.xlane.f32.xlu0 %v926
        %v928 = vpop.xlane.xlu0 %927
        %v929 = vrot.slane %v928, 4
        %v930 = vmin.f32 %v928, %v929
        %v931 = vrot.slane %v930, 2
        %v932 = vmin.f32 %v930, %v931
        %v933 = vrot.slane %v932, 1
        %v934 = vmin.f32 %v932, %v933
        %v935 = vsel %vm300, %v922, -inf
        %v936 = vsel %vm300, %v923, -inf
        %v937 = vmax.f32 %v935, %v936
        %938 = vmax.xlane.f32.xlu0 %v937
        %v939 = vpop.xlane.xlu0 %938
        %v940 = vrot.slane %v939, 4
        %v941 = vmax.f32 %v939, %v940
        %v942 = vrot.slane %v941, 2
        %v943 = vmax.f32 %v941, %v942
        %v944 = vrot.slane %v943, 1
        %v945 = vmax.f32 %v943, %v944
        %v946 = vsub.f32 %v945, %v934
        %vm947 = vcmp.ne.f32.partialorder %v946, 0.0
        %v948 = vsel %vm947, %v946, 1.0
        %v949 = vrcp.pop %v948
        %v950 = vmul.f32 1.0, %v949
        %v951 = vsel %vm947, %v934, 0.0
        %v952 = vsub.f32 %v922, %v951
        %v953 = vsub.f32 %v923, %v951
        %v954 = vmul.f32 %v952, %v950
        %v955 = vmul.f32 %v953, %v950
        %v956 = vsel %vm300, %v954, 0.0
        %v957 = vsel %vm300, %v955, 0.0
        %v958 = vadd.f32 %v956, %v957
        %959 = vadd.xlane.f32.xlu0 %v958
        %v960 = vpop.xlane.xlu0 %959
        %v961 = vrot.slane %v960, 4
        %v962 = vadd.f32 %v960, %v961
        %v963 = vrot.slane %v962, 2
        %v964 = vadd.f32 %v962, %v963
        %v965 = vrot.slane %v964, 1
        %v966 = vadd.f32 %v964, %v965
        %s967 = vtos %v966
        %s968 = smul.f32 %s967, 49.0
        %s969 = sadd.f32 %s865, %s968
        %v970 = vrot.slane %v954, 1
        %v971 = vrot.slane %v955, 1
        %v972 = vsel %vm233, %v970, %v971
        %v973 = vsel %vm233, %v971, %v970
        %v974 = vmul.f32 %v972, %v217
        %v975 = vmul.f32 %v973, %v218
        %v976 = vrot.slane %v954, 7
        %v977 = vrot.slane %v955, 7
        %v978 = vsel %vm240, %v976, %v977
        %v979 = vsel %vm240, %v977, %v976
        %v980 = vmul.f32 %v979, %v223
        %v981 = vmul.f32 %v978, %v224
        %982 = vrot.lane.b32.xlu0 %v954, 16
        %v983 = vpop.permute.xlu0 %982
        %v984 = vsel %vm245, %v983, %v954
        %985 = vrot.lane.b32.xlu0 %v955, 16
        %v986 = vpop.permute.xlu0 %985
        %v987 = vsel %vm245, %v986, %v955
        %988 = vrot.lane.b32.xlu0 %v984, 16
        %v989 = vpop.permute.xlu0 %988
        %990 = vrot.lane.b32.xlu0 %v987, 16
        %v991 = vpop.permute.xlu0 %990
        %v992 = vsel %vm245, %v989, %v954
        %v993 = vsel %vm245, %v991, %v955
        %v994 = vmul.f32 %v992, %v260
        %v995 = vmul.f32 %v993, %v260
        %v996 = vmul.f32 %v992, %v266
        %v997 = vmul.f32 %v993, %v266
        %v998 = vadd.f32 %v954, %v974
        %v999 = vadd.f32 %v955, %v975
        %v1000 = vadd.f32 %v998, %v980
        %v1001 = vadd.f32 %v999, %v981
        %1004 = vrot.lane.b32.xlu0 %v994, 127
        %v1005 = vpop.permute.xlu0 %1004
        %1006 = vrot.lane.b32.xlu0 %v995, 127
        %v1007 = vpop.permute.xlu0 %1006
        %v1010 = vadd.f32 %v1000, %v1005
        %v1011 = vadd.f32 %v1001, %v1007
        %1014 = vrot.lane.b32.xlu0 %v996, 113
        %v1015 = vpop.permute.xlu0 %1014
        %1016 = vrot.lane.b32.xlu0 %v997, 113
        %v1017 = vpop.permute.xlu0 %1016
        %v1020 = vadd.f32 %v1010, %v1015
        %v1021 = vadd.f32 %v1011, %v1017
        %v1022 = vmul.f32 %v1020, 0.2
        %v1023 = vmul.f32 %v1021, 0.2
        %v1024 = vsub.f32 %v1022, 0.5
        %v1025 = vsub.f32 %v1023, 0.5
        %v1026 = vmax.f32 %v1024, 0.0
        %v1027 = vmax.f32 %v1025, 0.0
        %v1028 = vsel %vm300, %v1026, inf
        %v1029 = vsel %vm300, %v1027, inf
        %v1030 = vmin.f32 %v1028, %v1029
        %1031 = vmin.xlane.f32.xlu0 %v1030
        %v1032 = vpop.xlane.xlu0 %1031
        %v1033 = vrot.slane %v1032, 4
        %v1034 = vmin.f32 %v1032, %v1033
        %v1035 = vrot.slane %v1034, 2
        %v1036 = vmin.f32 %v1034, %v1035
        %v1037 = vrot.slane %v1036, 1
        %v1038 = vmin.f32 %v1036, %v1037
        %v1039 = vsel %vm300, %v1026, -inf
        %v1040 = vsel %vm300, %v1027, -inf
        %v1041 = vmax.f32 %v1039, %v1040
        %1042 = vmax.xlane.f32.xlu0 %v1041
        %v1043 = vpop.xlane.xlu0 %1042
        %v1044 = vrot.slane %v1043, 4
        %v1045 = vmax.f32 %v1043, %v1044
        %v1046 = vrot.slane %v1045, 2
        %v1047 = vmax.f32 %v1045, %v1046
        %v1048 = vrot.slane %v1047, 1
        %v1049 = vmax.f32 %v1047, %v1048
        %v1050 = vsub.f32 %v1049, %v1038
        %vm1051 = vcmp.ne.f32.partialorder %v1050, 0.0
        %v1052 = vsel %vm1051, %v1050, 1.0
        %v1053 = vrcp.pop %v1052
        %v1054 = vmul.f32 1.0, %v1053
        %v1055 = vsel %vm1051, %v1038, 0.0
        %v1056 = vsub.f32 %v1026, %v1055
        %v1057 = vsub.f32 %v1027, %v1055
        %v1058 = vmul.f32 %v1056, %v1054
        %v1059 = vmul.f32 %v1057, %v1054
        %v1060 = vsel %vm300, %v1058, 0.0
        %v1061 = vsel %vm300, %v1059, 0.0
        %v1062 = vadd.f32 %v1060, %v1061
        %1063 = vadd.xlane.f32.xlu0 %v1062
        %v1064 = vpop.xlane.xlu0 %1063
        %v1065 = vrot.slane %v1064, 4
        %v1066 = vadd.f32 %v1064, %v1065
        %v1067 = vrot.slane %v1066, 2
        %v1068 = vadd.f32 %v1066, %v1067
        %v1069 = vrot.slane %v1068, 1
        %v1070 = vadd.f32 %v1068, %v1069
        %s1071 = vtos %v1070
        %s1072 = smul.f32 %s1071, 64.0
        %s1073 = sadd.f32 %s969, %s1072
        %v1074 = vrot.slane %v1058, 1
        %v1075 = vrot.slane %v1059, 1
        %v1076 = vsel %vm233, %v1074, %v1075
        %v1077 = vsel %vm233, %v1075, %v1074
        %v1078 = vmul.f32 %v1076, %v217
        %v1079 = vmul.f32 %v1077, %v218
        %v1080 = vrot.slane %v1058, 7
        %v1081 = vrot.slane %v1059, 7
        %v1082 = vsel %vm240, %v1080, %v1081
        %v1083 = vsel %vm240, %v1081, %v1080
        %v1084 = vmul.f32 %v1083, %v223
        %v1085 = vmul.f32 %v1082, %v224
        %1086 = vrot.lane.b32.xlu0 %v1058, 16
        %v1087 = vpop.permute.xlu0 %1086
        %v1088 = vsel %vm245, %v1087, %v1058
        %1089 = vrot.lane.b32.xlu0 %v1059, 16
        %v1090 = vpop.permute.xlu0 %1089
        %v1091 = vsel %vm245, %v1090, %v1059
        %1092 = vrot.lane.b32.xlu0 %v1088, 16
        %v1093 = vpop.permute.xlu0 %1092
        %1094 = vrot.lane.b32.xlu0 %v1091, 16
        %v1095 = vpop.permute.xlu0 %1094
        %v1096 = vsel %vm245, %v1093, %v1058
        %v1097 = vsel %vm245, %v1095, %v1059
        %v1098 = vmul.f32 %v1096, %v260
        %v1099 = vmul.f32 %v1097, %v260
        %v1100 = vmul.f32 %v1096, %v266
        %v1101 = vmul.f32 %v1097, %v266
        %v1102 = vadd.f32 %v1058, %v1078
        %v1103 = vadd.f32 %v1059, %v1079
        %v1104 = vadd.f32 %v1102, %v1084
        %v1105 = vadd.f32 %v1103, %v1085
        %1108 = vrot.lane.b32.xlu0 %v1098, 127
        %v1109 = vpop.permute.xlu0 %1108
        %1110 = vrot.lane.b32.xlu0 %v1099, 127
        %v1111 = vpop.permute.xlu0 %1110
        %v1114 = vadd.f32 %v1104, %v1109
        %v1115 = vadd.f32 %v1105, %v1111
        %1118 = vrot.lane.b32.xlu0 %v1100, 113
        %v1119 = vpop.permute.xlu0 %1118
        %1120 = vrot.lane.b32.xlu0 %v1101, 113
        %v1121 = vpop.permute.xlu0 %1120
        %v1124 = vadd.f32 %v1114, %v1119
        %v1125 = vadd.f32 %v1115, %v1121
        %v1126 = vmul.f32 %v1124, 0.2
        %v1127 = vmul.f32 %v1125, 0.2
        %v1128 = vsub.f32 %v1126, 0.5
        %v1129 = vsub.f32 %v1127, 0.5
        %v1130 = vmax.f32 %v1128, 0.0
        %v1131 = vmax.f32 %v1129, 0.0
        %v1132 = vsel %vm300, %v1130, inf
        %v1133 = vsel %vm300, %v1131, inf
        %v1134 = vmin.f32 %v1132, %v1133
        %1135 = vmin.xlane.f32.xlu0 %v1134
        %v1136 = vpop.xlane.xlu0 %1135
        %v1137 = vrot.slane %v1136, 4
        %v1138 = vmin.f32 %v1136, %v1137
        %v1139 = vrot.slane %v1138, 2
        %v1140 = vmin.f32 %v1138, %v1139
        %v1141 = vrot.slane %v1140, 1
        %v1142 = vmin.f32 %v1140, %v1141
        %v1143 = vsel %vm300, %v1130, -inf
        %v1144 = vsel %vm300, %v1131, -inf
        %v1145 = vmax.f32 %v1143, %v1144
        %1146 = vmax.xlane.f32.xlu0 %v1145
        %v1147 = vpop.xlane.xlu0 %1146
        %v1148 = vrot.slane %v1147, 4
        %v1149 = vmax.f32 %v1147, %v1148
        %v1150 = vrot.slane %v1149, 2
        %v1151 = vmax.f32 %v1149, %v1150
        %v1152 = vrot.slane %v1151, 1
        %v1153 = vmax.f32 %v1151, %v1152
        %v1154 = vsub.f32 %v1153, %v1142
        %vm1155 = vcmp.ne.f32.partialorder %v1154, 0.0
        %v1156 = vsel %vm1155, %v1154, 1.0
        %v1157 = vrcp.pop %v1156
        %v1158 = vmul.f32 1.0, %v1157
        %v1159 = vsel %vm1155, %v1142, 0.0
        %v1160 = vsub.f32 %v1130, %v1159
        %v1161 = vsub.f32 %v1131, %v1159
        %v1162 = vmul.f32 %v1160, %v1158
        %v1163 = vmul.f32 %v1161, %v1158
        %v1164 = vsel %vm300, %v1162, 0.0
        %v1165 = vsel %vm300, %v1163, 0.0
        %v1166 = vadd.f32 %v1164, %v1165
        %1167 = vadd.xlane.f32.xlu0 %v1166
        %v1168 = vpop.xlane.xlu0 %1167
        %v1169 = vrot.slane %v1168, 4
        %v1170 = vadd.f32 %v1168, %v1169
        %v1171 = vrot.slane %v1170, 2
        %v1172 = vadd.f32 %v1170, %v1171
        %v1173 = vrot.slane %v1172, 1
        %v1174 = vadd.f32 %v1172, %v1173
        %s1175 = vtos %v1174
        %s1176 = smul.f32 %s1175, 81.0
        %s1177 = sadd.f32 %s1073, %s1176
        %v1178 = vrot.slane %v1162, 1
        %v1179 = vrot.slane %v1163, 1
        %v1180 = vsel %vm233, %v1178, %v1179
        %v1181 = vsel %vm233, %v1179, %v1178
        %v1182 = vmul.f32 %v1180, %v217
        %v1183 = vmul.f32 %v1181, %v218
        %v1184 = vrot.slane %v1162, 7
        %v1185 = vrot.slane %v1163, 7
        %v1186 = vsel %vm240, %v1184, %v1185
        %v1187 = vsel %vm240, %v1185, %v1184
        %v1188 = vmul.f32 %v1187, %v223
        %v1189 = vmul.f32 %v1186, %v224
        %1190 = vrot.lane.b32.xlu0 %v1162, 16
        %v1191 = vpop.permute.xlu0 %1190
        %v1192 = vsel %vm245, %v1191, %v1162
        %1193 = vrot.lane.b32.xlu0 %v1163, 16
        %v1194 = vpop.permute.xlu0 %1193
        %v1195 = vsel %vm245, %v1194, %v1163
        %1196 = vrot.lane.b32.xlu0 %v1192, 16
        %v1197 = vpop.permute.xlu0 %1196
        %1198 = vrot.lane.b32.xlu0 %v1195, 16
        %v1199 = vpop.permute.xlu0 %1198
        %v1200 = vsel %vm245, %v1197, %v1162
        %v1201 = vsel %vm245, %v1199, %v1163
        %v1202 = vmul.f32 %v1200, %v260
        %v1203 = vmul.f32 %v1201, %v260
        %v1204 = vmul.f32 %v1200, %v266
        %v1205 = vmul.f32 %v1201, %v266
        %v1206 = vadd.f32 %v1162, %v1182
        %v1207 = vadd.f32 %v1163, %v1183
        %v1208 = vadd.f32 %v1206, %v1188
        %v1209 = vadd.f32 %v1207, %v1189
        %1212 = vrot.lane.b32.xlu0 %v1202, 127
        %v1213 = vpop.permute.xlu0 %1212
        %1214 = vrot.lane.b32.xlu0 %v1203, 127
        %v1215 = vpop.permute.xlu0 %1214
        %v1218 = vadd.f32 %v1208, %v1213
        %v1219 = vadd.f32 %v1209, %v1215
        %1222 = vrot.lane.b32.xlu0 %v1204, 113
        %v1223 = vpop.permute.xlu0 %1222
        %1224 = vrot.lane.b32.xlu0 %v1205, 113
        %v1225 = vpop.permute.xlu0 %1224
        %v1228 = vadd.f32 %v1218, %v1223
        %v1229 = vadd.f32 %v1219, %v1225
        %v1230 = vmul.f32 %v1228, 0.2
        %v1231 = vmul.f32 %v1229, 0.2
        %v1232 = vsub.f32 %v1230, 0.5
        %v1233 = vsub.f32 %v1231, 0.5
        %v1234 = vmax.f32 %v1232, 0.0
        %v1235 = vmax.f32 %v1233, 0.0
        %v1236 = vsel %vm300, %v1234, inf
        %v1237 = vsel %vm300, %v1235, inf
        %v1238 = vmin.f32 %v1236, %v1237
        %1239 = vmin.xlane.f32.xlu0 %v1238
        %v1240 = vpop.xlane.xlu0 %1239
        %v1241 = vrot.slane %v1240, 4
        %v1242 = vmin.f32 %v1240, %v1241
        %v1243 = vrot.slane %v1242, 2
        %v1244 = vmin.f32 %v1242, %v1243
        %v1245 = vrot.slane %v1244, 1
        %v1246 = vmin.f32 %v1244, %v1245
        %v1247 = vsel %vm300, %v1234, -inf
        %v1248 = vsel %vm300, %v1235, -inf
        %v1249 = vmax.f32 %v1247, %v1248
        %1250 = vmax.xlane.f32.xlu0 %v1249
        %v1251 = vpop.xlane.xlu0 %1250
        %v1252 = vrot.slane %v1251, 4
        %v1253 = vmax.f32 %v1251, %v1252
        %v1254 = vrot.slane %v1253, 2
        %v1255 = vmax.f32 %v1253, %v1254
        %v1256 = vrot.slane %v1255, 1
        %v1257 = vmax.f32 %v1255, %v1256
        %v1258 = vsub.f32 %v1257, %v1246
        %vm1259 = vcmp.ne.f32.partialorder %v1258, 0.0
        %v1260 = vsel %vm1259, %v1258, 1.0
        %v1261 = vrcp.pop %v1260
        %v1262 = vmul.f32 1.0, %v1261
        %v1263 = vsel %vm1259, %v1246, 0.0
        %v1264 = vsub.f32 %v1234, %v1263
        %v1265 = vsub.f32 %v1235, %v1263
        %v1266 = vmul.f32 %v1264, %v1262
        %v1267 = vmul.f32 %v1265, %v1262
        %v1268 = vsel %vm300, %v1266, 0.0
        %v1269 = vsel %vm300, %v1267, 0.0
        %v1270 = vadd.f32 %v1268, %v1269
        %1271 = vadd.xlane.f32.xlu0 %v1270
        %v1272 = vpop.xlane.xlu0 %1271
        %v1273 = vrot.slane %v1272, 4
        %v1274 = vadd.f32 %v1272, %v1273
        %v1275 = vrot.slane %v1274, 2
        %v1276 = vadd.f32 %v1274, %v1275
        %v1277 = vrot.slane %v1276, 1
        %v1278 = vadd.f32 %v1276, %v1277
        %s1279 = vtos %v1278
        %s1280 = smul.f32 %s1279, 100.0
        %s1281 = sadd.f32 %s1177, %s1280
        %v1282 = vstv %s1281
        %vm1283 = vcmask 0
        %1284 = vst.msk [vmem:[%s199] sm:$0x1] %vm1283, %v1282
        %p1285 = scmp.lt.s32.totalorder %s19, 1
        %s1286 = scalar_select %p1285, %s19, 1
        %s1287 = scalar_lea.vmem %s2, %s1286
        // Predicated region
        $region37: #{tpu_custom_call.1} parent=27 // pred_check
          %p1288 = pneg %p89
        $region38: #{tpu_custom_call.1} parent=27 // pred_check_branch
          %1290 = sbr.rel (%p1288) target = $region40
        $region39: #{tpu_custom_call.1} parent=27 // pred_region
          _
        $region40: #{tpu_custom_call.1} parent=27 // pred_fallthru
          _
      $region28: #{tpu_custom_call.1} parent=5 // pred_fallthru
        _
      %p1291 = scmp.le.s32.totalorder 2, %s14
      // Predicated region
      $region41: #{tpu_custom_call.1} parent=5 // pred_check
        %p1292 = pneg %p1291
      $region42: #{tpu_custom_call.1} parent=5 // pred_check_branch
        %1294 = sbr.rel (%p1292) target = $region44
      $region43: #{tpu_custom_call.1} parent=5 // pred_region
        %s1295 = ssub.s32 %s14, 2
        // Predicated region
        $region45: #{tpu_custom_call.1} parent=43 // pred_check
          %p1296 = pneg %p95
        $region46: #{tpu_custom_call.1} parent=43 // pred_check_branch
          %1298 = sbr.rel (%p1296) target = $region48
        $region47: #{tpu_custom_call.1} parent=43 // pred_region
          %p1299 = scmp.lt.s32.totalorder %s20, 1
          %s1300 = scalar_select %p1299, %s20, 1
          %s1301 = scalar_lea.vmem %s2, %s1300
        $region48: #{tpu_custom_call.1} parent=43 // pred_fallthru
          _
      $region44: #{tpu_custom_call.1} parent=5 // pred_fallthru
        _
    $region6: #{tpu_custom_call.1} parent=1 // loop_footer
      %s18 = sadd.s32 1, %s14
    $region7: #{tpu_custom_call.1} parent=1 // loop_footer_branch
      %13 = sbr.rel target = $region3
    $region8: #{tpu_custom_call.1} parent=1 // loop_exit
      _
    %1302 = vsyncpa [#allocation3], 1
    %s1303 = scalar_lea.sflag [#allocation3], 1
    %1304 = vsyncpa %s1303, 1
    %1305 = vsyncpa [#allocation5], 1
    %s1306 = scalar_lea.sflag [#allocation5], 1
    %1307 = vsyncpa %s1306, 1

</llo_original>
